<compile_context>
chip_gen: v5e
topology: v5e:2x2
jax: 0.10.0
libtpu: 0.0.40
codegen_flags: <defaults>
</compile_context>

<pallas_src>
import functools

import jax
import jax.numpy as jnp
from jax.experimental import pallas as pl
from jax.experimental.pallas import tpu as pltpu


def _stock_gru_kernel(T, Bp, B, num_layers,
                      x_ref, w_ih0_ref, w_ih_rest_ref, w_hh_ref,
                      b_i_ref, b_hn_ref, fc_ref, out_ref):
    """Fused multi-layer GRU + FC.

    x_ref        : (T*Bp, Din0) time-major input, batch padded to Bp (multiple of 8).
    w_ih0_ref    : (Din0, 3H)    layer-0 input weights, columns [r | z | n].
    w_ih_rest_ref: (max(L-1,1), H, 3H) input weights of layers >= 1.
    w_hh_ref     : (L, H, 3H)    recurrent weights, columns [r | z | n].
    b_i_ref      : (L, 3H)       [b_ir+b_hr, b_iz+b_hz, b_in]  (added to the input proj).
    b_hn_ref     : (L, H)        b_hn, added inside tanh as r * (gh_n + b_hn).
    fc_ref       : (H+1, 1)      rows 0..H-1 = W_fc^T, row H = b_fc.
    out_ref      : (B, 1)
    """
    f32 = jnp.float32
    L = num_layers
    H = w_hh_ref.shape[1]

    # ---- Hoisted, off the critical chain: whole-sequence layer-0 input projection.
    x = x_ref[...]                                                      # (T*Bp, Din0)
    gi0 = (jnp.dot(x, w_ih0_ref[...], preferred_element_type=f32)
           + b_i_ref[0:1, :])                                           # (T*Bp, 3H)

    # ---- Hoist per-layer weights and bias broadcasts out of the wave loop
    # (JAX does not CSE broadcast_in_dim; keep broadcasts out of the recurrence).
    w_hh = [w_hh_ref[l] for l in range(L)]                              # (H, 3H)
    w_ih = [None] + [w_ih_rest_ref[l - 1] for l in range(1, L)]         # (H, 3H), layers >= 1
    b_i = [None] + [jnp.broadcast_to(b_i_ref[l:l + 1, :], (Bp, 3 * H))
                    for l in range(1, L)]
    b_hn = [jnp.broadcast_to(b_hn_ref[l:l + 1, :], (Bp, H)) for l in range(L)]

    # ---- Wavefront over (layer, time): wave w runs layer l at t = w - l.
    # Step bodies within a wave depend only on previous-wave values -> latencies overlap.
    h = [jnp.zeros((Bp, H), f32) for _ in range(L)]
    for w in range(T + L - 1):                        # small static T/L -> fully unrolled
        h_prev = list(h)                              # snapshot of wave w-1 outputs
        for l in range(L):
            t = w - l
            if t < 0 or t >= T:
                continue
            if l == 0:
                gi = gi0[t * Bp:(t + 1) * Bp, :]      # Bp multiple of 8 -> aligned slice
            else:
                # Per-step input projection of upper layers; input is the previous
                # wave's output, so this dot sits off the dependent chain of the wave.
                gi = (jnp.dot(h_prev[l - 1], w_ih[l], preferred_element_type=f32)
                      + b_i[l])
            # Packed recurrent projection: ONE MXU push per step instead of three.
            gh = jnp.dot(h_prev[l], w_hh[l], preferred_element_type=f32)   # (Bp, 3H)
            r = jax.nn.sigmoid(gi[:, 0:H] + gh[:, 0:H])
            z = jax.nn.sigmoid(gi[:, H:2 * H] + gh[:, H:2 * H])
            n = jnp.tanh(gi[:, 2 * H:3 * H] + r * (gh[:, 2 * H:3 * H] + b_hn[l]))
            h[l] = (1.0 - z) * n + z * h_prev[l]
        # TODO(synk): training-mode inter-layer dropout (p=0.2) not implemented
        # (eval-mode forward == identity).

    # ---- Final FC on the last layer's last-step hidden state (== out[:, -1, :] @ W^T + b).
    y = (jnp.dot(h[L - 1], fc_ref[0:H, :], preferred_element_type=f32)
         + fc_ref[H:H + 1, :])                                           # (Bp, 1)
    out_ref[...] = y[0:B, :]


@jax.jit
def stock_gru_forward(params, x_btd):
    """x_btd: (B, T, input_size) float32 (PyTorch batch_first) -> (B, 1) float32."""
    B, T, din0 = x_btd.shape
    L = len(params["gru"])
    H = params["gru"][0]["w_hh"].shape[1]          # w_hh: (3H, H)
    Bp = ((B + 7) // 8) * 8                        # pad batch to sublane tile (8)

    # Time-major + batch pad (one small fused XLA layout op, cheap next to the kernel).
    x = jnp.transpose(x_btd.astype(jnp.float32), (1, 0, 2))      # (T, B, Din0)
    x = jnp.pad(x, ((0, 0), (0, Bp - B), (0, 0)))                # (T, Bp, Din0)
    x_flat = x.reshape(T * Bp, din0)

    # Host-side weight packing: few operands, packed [r|z|n] gate columns,
    # r/z biases pre-summed, b_hn kept separate (PyTorch GRU semantics).
    w_ih_list, w_hh_list, b_i_list, b_hn_list = [], [], [], []
    for lp in params["gru"]:
        w_ih_list.append(lp["w_ih"].T.astype(jnp.float32))       # (Din_l, 3H)
        w_hh_list.append(lp["w_hh"].T.astype(jnp.float32))       # (H, 3H)
        b_i_list.append(jnp.concatenate(
            [lp["b_ih"][:2 * H] + lp["b_hh"][:2 * H],            # r/z biases pre-summed
             lp["b_ih"][2 * H:]]).astype(jnp.float32))           # b_in stays separate
        b_hn_list.append(lp["b_hh"][2 * H:].astype(jnp.float32)) # b_hn (inside tanh)
    w_ih0 = w_ih_list[0]                                         # (Din0, 3H)
    if L > 1:
        w_ih_rest = jnp.stack(w_ih_list[1:])                     # (L-1, H, 3H)
    else:
        w_ih_rest = jnp.zeros((1, H, 3 * H), jnp.float32)        # unused dummy
    w_hh_all = jnp.stack(w_hh_list)                              # (L, H, 3H)
    b_i_all = jnp.stack(b_i_list)                                # (L, 3H)
    b_hn_all = jnp.stack(b_hn_list)                              # (L, H)
    fc_pack = jnp.concatenate(
        [params["fc"]["weight"].T.astype(jnp.float32),
         params["fc"]["bias"].reshape(1, 1).astype(jnp.float32)], axis=0)   # (H+1, 1)

    inputs = [x_flat, w_ih0, w_ih_rest, w_hh_all, b_i_all, b_hn_all, fc_pack]
    kernel = functools.partial(_stock_gru_kernel, T, Bp, B, L)
    return pl.pallas_call(
        kernel,
        out_shape=jax.ShapeDtypeStruct((B, 1), jnp.float32),
        in_specs=[pl.BlockSpec(memory_space=pltpu.MemorySpace.VMEM)] * len(inputs),
        out_specs=pl.BlockSpec(memory_space=pltpu.MemorySpace.VMEM),
    )(*inputs)


def init_params(key, input_size, hidden_size, num_layers):
    """Deterministic PyTorch-layout params, U(-1/sqrt(H), 1/sqrt(H)); gate order [r, z, n]."""
    params = {"gru": [], "fc": {}}
    bound = 1.0 / (hidden_size ** 0.5)
    for layer in range(num_layers):
        din = input_size if layer == 0 else hidden_size
        key, k1, k2, k3, k4 = jax.random.split(key, 5)
        params["gru"].append({
            "w_ih": jax.random.uniform(k1, (3 * hidden_size, din), jnp.float32, -bound, bound),
            "w_hh": jax.random.uniform(k2, (3 * hidden_size, hidden_size), jnp.float32, -bound, bound),
            "b_ih": jax.random.uniform(k3, (3 * hidden_size,), jnp.float32, -bound, bound),
            "b_hh": jax.random.uniform(k4, (3 * hidden_size,), jnp.float32, -bound, bound),
        })
    key, k1, k2 = jax.random.split(key, 3)
    params["fc"] = {
        "weight": jax.random.uniform(k1, (1, hidden_size), jnp.float32, -bound, bound),
        "bias": jax.random.uniform(k2, (1,), jnp.float32, -bound, bound),
    }
    return params


if __name__ == "__main__":
    B, T, INPUT_SIZE, HIDDEN, LAYERS = 2, 8, 4, 32, 2

    key = jax.random.PRNGKey(0)
    key, kx = jax.random.split(key)
    x = jax.random.normal(kx, (B, T, INPUT_SIZE), dtype=jnp.float32)

    params = init_params(key, INPUT_SIZE, HIDDEN, LAYERS)

    out = stock_gru_forward(params, x)
    jax.block_until_ready(out)
    assert out.shape == (B, 1), out.shape
    print("KERNEL_OK")
</pallas_src>

<mosaic_0001>
module attributes {stable_mosaic.version = 11 : i64} {
  func.func @_stock_gru_kernel(%arg0: memref<64x4xf32, #tpu.memory_space<vmem>>, %arg1: memref<4x96xf32, #tpu.memory_space<vmem>>, %arg2: memref<1x32x96xf32, #tpu.memory_space<vmem>>, %arg3: memref<2x32x96xf32, #tpu.memory_space<vmem>>, %arg4: memref<2x96xf32, #tpu.memory_space<vmem>>, %arg5: memref<2x32xf32, #tpu.memory_space<vmem>>, %arg6: memref<33x1xf32, #tpu.memory_space<vmem>>, %arg7: memref<2x1xf32, #tpu.memory_space<vmem>>) attributes {dimension_semantics = [], scalar_prefetch = 0 : i64, scratch_operands = 0 : i64, tpu.core_type = #tpu.core_type<tc>} {
    %c0 = arith.constant 0 : index
    %c0_0 = arith.constant 0 : index
    %0 = vector.load %arg0[%c0, %c0_0] : memref<64x4xf32, #tpu.memory_space<vmem>>, vector<64x4xf32>
    %c0_1 = arith.constant 0 : index
    %c0_2 = arith.constant 0 : index
    %1 = vector.load %arg1[%c0_1, %c0_2] : memref<4x96xf32, #tpu.memory_space<vmem>>, vector<4x96xf32>
    %cst = arith.constant dense<0.000000e+00> : vector<64x96xf32>
    %2 = tpu.matmul %0, %1, %cst {dimension_numbers = #tpu.dot_dimension_numbers<[1], [0], [0], [1], [0, 0, 1, 1], [], []>} : vector<64x4xf32>, vector<4x96xf32>, vector<64x96xf32> -> vector<64x96xf32>
    %c0_3 = arith.constant 0 : index
    %c0_4 = arith.constant 0 : index
    %3 = vector.load %arg4[%c0_3, %c0_4] : memref<2x96xf32, #tpu.memory_space<vmem>>, vector<1x96xf32>
    %4 = vector.broadcast %3 : vector<1x96xf32> to vector<64x96xf32>
    %5 = arith.addf %2, %4 : vector<64x96xf32>
    %c0_5 = arith.constant 0 : index
    %c0_6 = arith.constant 0 : index
    %c0_7 = arith.constant 0 : index
    %6 = vector.load %arg3[%c0_5, %c0_6, %c0_7] : memref<2x32x96xf32, #tpu.memory_space<vmem>>, vector<1x32x96xf32>
    %7 = vector.shape_cast %6 : vector<1x32x96xf32> to vector<32x96xf32>
    %c1 = arith.constant 1 : index
    %c0_8 = arith.constant 0 : index
    %c0_9 = arith.constant 0 : index
    %8 = vector.load %arg3[%c1, %c0_8, %c0_9] : memref<2x32x96xf32, #tpu.memory_space<vmem>>, vector<1x32x96xf32>
    %9 = vector.shape_cast %8 : vector<1x32x96xf32> to vector<32x96xf32>
    %c0_10 = arith.constant 0 : index
    %c0_11 = arith.constant 0 : index
    %c0_12 = arith.constant 0 : index
    %10 = vector.load %arg2[%c0_10, %c0_11, %c0_12] : memref<1x32x96xf32, #tpu.memory_space<vmem>>, vector<1x32x96xf32>
    %11 = vector.shape_cast %10 : vector<1x32x96xf32> to vector<32x96xf32>
    %c1_13 = arith.constant 1 : index
    %c0_14 = arith.constant 0 : index
    %12 = vector.load %arg4[%c1_13, %c0_14] : memref<2x96xf32, #tpu.memory_space<vmem>>, vector<1x96xf32>
    %13 = vector.shape_cast %12 : vector<1x96xf32> to vector<1x96xf32>
    %14 = vector.broadcast %13 : vector<1x96xf32> to vector<8x96xf32>
    %c0_15 = arith.constant 0 : index
    %c0_16 = arith.constant 0 : index
    %15 = vector.load %arg5[%c0_15, %c0_16] : memref<2x32xf32, #tpu.memory_space<vmem>>, vector<1x32xf32>
    %16 = vector.shape_cast %15 : vector<1x32xf32> to vector<1x32xf32>
    %17 = vector.broadcast %16 : vector<1x32xf32> to vector<8x32xf32>
    %c1_17 = arith.constant 1 : index
    %c0_18 = arith.constant 0 : index
    %18 = vector.load %arg5[%c1_17, %c0_18] : memref<2x32xf32, #tpu.memory_space<vmem>>, vector<1x32xf32>
    %19 = vector.shape_cast %18 : vector<1x32xf32> to vector<1x32xf32>
    %20 = vector.broadcast %19 : vector<1x32xf32> to vector<8x32xf32>
    %cst_19 = arith.constant 0.000000e+00 : f32
    %21 = vector.broadcast %cst_19 : f32 to vector<8x32xf32>
    %cst_20 = arith.constant 0.000000e+00 : f32
    %22 = vector.broadcast %cst_20 : f32 to vector<8x32xf32>
    %23 = vector.extract_strided_slice %5 {offsets = [0, 0], sizes = [8, 96], strides = [1, 1]} : vector<64x96xf32> to vector<8x96xf32>
    %cst_21 = arith.constant dense<0.000000e+00> : vector<8x96xf32>
    %24 = tpu.matmul %21, %7, %cst_21 {dimension_numbers = #tpu.dot_dimension_numbers<[1], [0], [0], [1], [0, 0, 1, 1], [], []>} : vector<8x32xf32>, vector<32x96xf32>, vector<8x96xf32> -> vector<8x96xf32>
    %25 = vector.extract_strided_slice %23 {offsets = [0, 0], sizes = [8, 32], strides = [1, 1]} : vector<8x96xf32> to vector<8x32xf32>
    %26 = vector.extract_strided_slice %24 {offsets = [0, 0], sizes = [8, 32], strides = [1, 1]} : vector<8x96xf32> to vector<8x32xf32>
    %27 = arith.addf %25, %26 : vector<8x32xf32>
    %28 = arith.negf %27 : vector<8x32xf32>
    %29 = math.exp %28 : vector<8x32xf32>
    %cst_22 = arith.constant 1.000000e+00 : f32
    %30 = vector.broadcast %cst_22 : f32 to vector<8x32xf32>
    %31 = arith.addf %30, %29 : vector<8x32xf32>
    %32 = arith.divf %30, %31 : vector<8x32xf32>
    %33 = vector.extract_strided_slice %23 {offsets = [0, 32], sizes = [8, 32], strides = [1, 1]} : vector<8x96xf32> to vector<8x32xf32>
    %34 = vector.extract_strided_slice %24 {offsets = [0, 32], sizes = [8, 32], strides = [1, 1]} : vector<8x96xf32> to vector<8x32xf32>
    %35 = arith.addf %33, %34 : vector<8x32xf32>
    %36 = arith.negf %35 : vector<8x32xf32>
    %37 = math.exp %36 : vector<8x32xf32>
    %cst_23 = arith.constant 1.000000e+00 : f32
    %38 = vector.broadcast %cst_23 : f32 to vector<8x32xf32>
    %39 = arith.addf %38, %37 : vector<8x32xf32>
    %40 = arith.divf %38, %39 : vector<8x32xf32>
    %41 = vector.extract_strided_slice %23 {offsets = [0, 64], sizes = [8, 32], strides = [1, 1]} : vector<8x96xf32> to vector<8x32xf32>
    %42 = vector.extract_strided_slice %24 {offsets = [0, 64], sizes = [8, 32], strides = [1, 1]} : vector<8x96xf32> to vector<8x32xf32>
    %43 = arith.addf %42, %17 : vector<8x32xf32>
    %44 = arith.mulf %32, %43 : vector<8x32xf32>
    %45 = arith.addf %41, %44 : vector<8x32xf32>
    %46 = math.tanh %45 : vector<8x32xf32>
    %cst_24 = arith.constant 1.000000e+00 : f32
    %47 = vector.broadcast %cst_24 : f32 to vector<8x32xf32>
    %48 = arith.subf %47, %40 : vector<8x32xf32>
    %49 = arith.mulf %48, %46 : vector<8x32xf32>
    %50 = arith.mulf %40, %21 : vector<8x32xf32>
    %51 = arith.addf %49, %50 : vector<8x32xf32>
    %52 = vector.extract_strided_slice %5 {offsets = [8, 0], sizes = [8, 96], strides = [1, 1]} : vector<64x96xf32> to vector<8x96xf32>
    %cst_25 = arith.constant dense<0.000000e+00> : vector<8x96xf32>
    %53 = tpu.matmul %51, %7, %cst_25 {dimension_numbers = #tpu.dot_dimension_numbers<[1], [0], [0], [1], [0, 0, 1, 1], [], []>} : vector<8x32xf32>, vector<32x96xf32>, vector<8x96xf32> -> vector<8x96xf32>
    %54 = vector.extract_strided_slice %52 {offsets = [0, 0], sizes = [8, 32], strides = [1, 1]} : vector<8x96xf32> to vector<8x32xf32>
    %55 = vector.extract_strided_slice %53 {offsets = [0, 0], sizes = [8, 32], strides = [1, 1]} : vector<8x96xf32> to vector<8x32xf32>
    %56 = arith.addf %54, %55 : vector<8x32xf32>
    %57 = arith.negf %56 : vector<8x32xf32>
    %58 = math.exp %57 : vector<8x32xf32>
    %cst_26 = arith.constant 1.000000e+00 : f32
    %59 = vector.broadcast %cst_26 : f32 to vector<8x32xf32>
    %60 = arith.addf %59, %58 : vector<8x32xf32>
    %61 = arith.divf %59, %60 : vector<8x32xf32>
    %62 = vector.extract_strided_slice %52 {offsets = [0, 32], sizes = [8, 32], strides = [1, 1]} : vector<8x96xf32> to vector<8x32xf32>
    %63 = vector.extract_strided_slice %53 {offsets = [0, 32], sizes = [8, 32], strides = [1, 1]} : vector<8x96xf32> to vector<8x32xf32>
    %64 = arith.addf %62, %63 : vector<8x32xf32>
    %65 = arith.negf %64 : vector<8x32xf32>
    %66 = math.exp %65 : vector<8x32xf32>
    %cst_27 = arith.constant 1.000000e+00 : f32
    %67 = vector.broadcast %cst_27 : f32 to vector<8x32xf32>
    %68 = arith.addf %67, %66 : vector<8x32xf32>
    %69 = arith.divf %67, %68 : vector<8x32xf32>
    %70 = vector.extract_strided_slice %52 {offsets = [0, 64], sizes = [8, 32], strides = [1, 1]} : vector<8x96xf32> to vector<8x32xf32>
    %71 = vector.extract_strided_slice %53 {offsets = [0, 64], sizes = [8, 32], strides = [1, 1]} : vector<8x96xf32> to vector<8x32xf32>
    %72 = arith.addf %71, %17 : vector<8x32xf32>
    %73 = arith.mulf %61, %72 : vector<8x32xf32>
    %74 = arith.addf %70, %73 : vector<8x32xf32>
    %75 = math.tanh %74 : vector<8x32xf32>
    %cst_28 = arith.constant 1.000000e+00 : f32
    %76 = vector.broadcast %cst_28 : f32 to vector<8x32xf32>
    %77 = arith.subf %76, %69 : vector<8x32xf32>
    %78 = arith.mulf %77, %75 : vector<8x32xf32>
    %79 = arith.mulf %69, %51 : vector<8x32xf32>
    %80 = arith.addf %78, %79 : vector<8x32xf32>
    %cst_29 = arith.constant dense<0.000000e+00> : vector<8x96xf32>
    %81 = tpu.matmul %51, %11, %cst_29 {dimension_numbers = #tpu.dot_dimension_numbers<[1], [0], [0], [1], [0, 0, 1, 1], [], []>} : vector<8x32xf32>, vector<32x96xf32>, vector<8x96xf32> -> vector<8x96xf32>
    %82 = arith.addf %81, %14 : vector<8x96xf32>
    %cst_30 = arith.constant dense<0.000000e+00> : vector<8x96xf32>
    %83 = tpu.matmul %22, %9, %cst_30 {dimension_numbers = #tpu.dot_dimension_numbers<[1], [0], [0], [1], [0, 0, 1, 1], [], []>} : vector<8x32xf32>, vector<32x96xf32>, vector<8x96xf32> -> vector<8x96xf32>
    %84 = vector.extract_strided_slice %82 {offsets = [0, 0], sizes = [8, 32], strides = [1, 1]} : vector<8x96xf32> to vector<8x32xf32>
    %85 = vector.extract_strided_slice %83 {offsets = [0, 0], sizes = [8, 32], strides = [1, 1]} : vector<8x96xf32> to vector<8x32xf32>
    %86 = arith.addf %84, %85 : vector<8x32xf32>
    %87 = arith.negf %86 : vector<8x32xf32>
    %88 = math.exp %87 : vector<8x32xf32>
    %cst_31 = arith.constant 1.000000e+00 : f32
    %89 = vector.broadcast %cst_31 : f32 to vector<8x32xf32>
    %90 = arith.addf %89, %88 : vector<8x32xf32>
    %91 = arith.divf %89, %90 : vector<8x32xf32>
    %92 = vector.extract_strided_slice %82 {offsets = [0, 32], sizes = [8, 32], strides = [1, 1]} : vector<8x96xf32> to vector<8x32xf32>
    %93 = vector.extract_strided_slice %83 {offsets = [0, 32], sizes = [8, 32], strides = [1, 1]} : vector<8x96xf32> to vector<8x32xf32>
    %94 = arith.addf %92, %93 : vector<8x32xf32>
    %95 = arith.negf %94 : vector<8x32xf32>
    %96 = math.exp %95 : vector<8x32xf32>
    %cst_32 = arith.constant 1.000000e+00 : f32
    %97 = vector.broadcast %cst_32 : f32 to vector<8x32xf32>
    %98 = arith.addf %97, %96 : vector<8x32xf32>
    %99 = arith.divf %97, %98 : vector<8x32xf32>
    %100 = vector.extract_strided_slice %82 {offsets = [0, 64], sizes = [8, 32], strides = [1, 1]} : vector<8x96xf32> to vector<8x32xf32>
    %101 = vector.extract_strided_slice %83 {offsets = [0, 64], sizes = [8, 32], strides = [1, 1]} : vector<8x96xf32> to vector<8x32xf32>
    %102 = arith.addf %101, %20 : vector<8x32xf32>
    %103 = arith.mulf %91, %102 : vector<8x32xf32>
    %104 = arith.addf %100, %103 : vector<8x32xf32>
    %105 = math.tanh %104 : vector<8x32xf32>
    %cst_33 = arith.constant 1.000000e+00 : f32
    %106 = vector.broadcast %cst_33 : f32 to vector<8x32xf32>
    %107 = arith.subf %106, %99 : vector<8x32xf32>
    %108 = arith.mulf %107, %105 : vector<8x32xf32>
    %109 = arith.mulf %99, %22 : vector<8x32xf32>
    %110 = arith.addf %108, %109 : vector<8x32xf32>
    %111 = vector.extract_strided_slice %5 {offsets = [16, 0], sizes = [8, 96], strides = [1, 1]} : vector<64x96xf32> to vector<8x96xf32>
    %cst_34 = arith.constant dense<0.000000e+00> : vector<8x96xf32>
    %112 = tpu.matmul %80, %7, %cst_34 {dimension_numbers = #tpu.dot_dimension_numbers<[1], [0], [0], [1], [0, 0, 1, 1], [], []>} : vector<8x32xf32>, vector<32x96xf32>, vector<8x96xf32> -> vector<8x96xf32>
    %113 = vector.extract_strided_slice %111 {offsets = [0, 0], sizes = [8, 32], strides = [1, 1]} : vector<8x96xf32> to vector<8x32xf32>
    %114 = vector.extract_strided_slice %112 {offsets = [0, 0], sizes = [8, 32], strides = [1, 1]} : vector<8x96xf32> to vector<8x32xf32>
    %115 = arith.addf %113, %114 : vector<8x32xf32>
    %116 = arith.negf %115 : vector<8x32xf32>
    %117 = math.exp %116 : vector<8x32xf32>
    %cst_35 = arith.constant 1.000000e+00 : f32
    %118 = vector.broadcast %cst_35 : f32 to vector<8x32xf32>
    %119 = arith.addf %118, %117 : vector<8x32xf32>
    %120 = arith.divf %118, %119 : vector<8x32xf32>
    %121 = vector.extract_strided_slice %111 {offsets = [0, 32], sizes = [8, 32], strides = [1, 1]} : vector<8x96xf32> to vector<8x32xf32>
    %122 = vector.extract_strided_slice %112 {offsets = [0, 32], sizes = [8, 32], strides = [1, 1]} : vector<8x96xf32> to vector<8x32xf32>
    %123 = arith.addf %121, %122 : vector<8x32xf32>
    %124 = arith.negf %123 : vector<8x32xf32>
    %125 = math.exp %124 : vector<8x32xf32>
    %cst_36 = arith.constant 1.000000e+00 : f32
    %126 = vector.broadcast %cst_36 : f32 to vector<8x32xf32>
    %127 = arith.addf %126, %125 : vector<8x32xf32>
    %128 = arith.divf %126, %127 : vector<8x32xf32>
    %129 = vector.extract_strided_slice %111 {offsets = [0, 64], sizes = [8, 32], strides = [1, 1]} : vector<8x96xf32> to vector<8x32xf32>
    %130 = vector.extract_strided_slice %112 {offsets = [0, 64], sizes = [8, 32], strides = [1, 1]} : vector<8x96xf32> to vector<8x32xf32>
    %131 = arith.addf %130, %17 : vector<8x32xf32>
    %132 = arith.mulf %120, %131 : vector<8x32xf32>
    %133 = arith.addf %129, %132 : vector<8x32xf32>
    %134 = math.tanh %133 : vector<8x32xf32>
    %cst_37 = arith.constant 1.000000e+00 : f32
    %135 = vector.broadcast %cst_37 : f32 to vector<8x32xf32>
    %136 = arith.subf %135, %128 : vector<8x32xf32>
    %137 = arith.mulf %136, %134 : vector<8x32xf32>
    %138 = arith.mulf %128, %80 : vector<8x32xf32>
    %139 = arith.addf %137, %138 : vector<8x32xf32>
    %cst_38 = arith.constant dense<0.000000e+00> : vector<8x96xf32>
    %140 = tpu.matmul %80, %11, %cst_38 {dimension_numbers = #tpu.dot_dimension_numbers<[1], [0], [0], [1], [0, 0, 1, 1], [], []>} : vector<8x32xf32>, vector<32x96xf32>, vector<8x96xf32> -> vector<8x96xf32>
    %141 = arith.addf %140, %14 : vector<8x96xf32>
    %cst_39 = arith.constant dense<0.000000e+00> : vector<8x96xf32>
    %142 = tpu.matmul %110, %9, %cst_39 {dimension_numbers = #tpu.dot_dimension_numbers<[1], [0], [0], [1], [0, 0, 1, 1], [], []>} : vector<8x32xf32>, vector<32x96xf32>, vector<8x96xf32> -> vector<8x96xf32>
    %143 = vector.extract_strided_slice %141 {offsets = [0, 0], sizes = [8, 32], strides = [1, 1]} : vector<8x96xf32> to vector<8x32xf32>
    %144 = vector.extract_strided_slice %142 {offsets = [0, 0], sizes = [8, 32], strides = [1, 1]} : vector<8x96xf32> to vector<8x32xf32>
    %145 = arith.addf %143, %144 : vector<8x32xf32>
    %146 = arith.negf %145 : vector<8x32xf32>
    %147 = math.exp %146 : vector<8x32xf32>
    %cst_40 = arith.constant 1.000000e+00 : f32
    %148 = vector.broadcast %cst_40 : f32 to vector<8x32xf32>
    %149 = arith.addf %148, %147 : vector<8x32xf32>
    %150 = arith.divf %148, %149 : vector<8x32xf32>
    %151 = vector.extract_strided_slice %141 {offsets = [0, 32], sizes = [8, 32], strides = [1, 1]} : vector<8x96xf32> to vector<8x32xf32>
    %152 = vector.extract_strided_slice %142 {offsets = [0, 32], sizes = [8, 32], strides = [1, 1]} : vector<8x96xf32> to vector<8x32xf32>
    %153 = arith.addf %151, %152 : vector<8x32xf32>
    %154 = arith.negf %153 : vector<8x32xf32>
    %155 = math.exp %154 : vector<8x32xf32>
    %cst_41 = arith.constant 1.000000e+00 : f32
    %156 = vector.broadcast %cst_41 : f32 to vector<8x32xf32>
    %157 = arith.addf %156, %155 : vector<8x32xf32>
    %158 = arith.divf %156, %157 : vector<8x32xf32>
    %159 = vector.extract_strided_slice %141 {offsets = [0, 64], sizes = [8, 32], strides = [1, 1]} : vector<8x96xf32> to vector<8x32xf32>
    %160 = vector.extract_strided_slice %142 {offsets = [0, 64], sizes = [8, 32], strides = [1, 1]} : vector<8x96xf32> to vector<8x32xf32>
    %161 = arith.addf %160, %20 : vector<8x32xf32>
    %162 = arith.mulf %150, %161 : vector<8x32xf32>
    %163 = arith.addf %159, %162 : vector<8x32xf32>
    %164 = math.tanh %163 : vector<8x32xf32>
    %cst_42 = arith.constant 1.000000e+00 : f32
    %165 = vector.broadcast %cst_42 : f32 to vector<8x32xf32>
    %166 = arith.subf %165, %158 : vector<8x32xf32>
    %167 = arith.mulf %166, %164 : vector<8x32xf32>
    %168 = arith.mulf %158, %110 : vector<8x32xf32>
    %169 = arith.addf %167, %168 : vector<8x32xf32>
    %170 = vector.extract_strided_slice %5 {offsets = [24, 0], sizes = [8, 96], strides = [1, 1]} : vector<64x96xf32> to vector<8x96xf32>
    %cst_43 = arith.constant dense<0.000000e+00> : vector<8x96xf32>
    %171 = tpu.matmul %139, %7, %cst_43 {dimension_numbers = #tpu.dot_dimension_numbers<[1], [0], [0], [1], [0, 0, 1, 1], [], []>} : vector<8x32xf32>, vector<32x96xf32>, vector<8x96xf32> -> vector<8x96xf32>
    %172 = vector.extract_strided_slice %170 {offsets = [0, 0], sizes = [8, 32], strides = [1, 1]} : vector<8x96xf32> to vector<8x32xf32>
    %173 = vector.extract_strided_slice %171 {offsets = [0, 0], sizes = [8, 32], strides = [1, 1]} : vector<8x96xf32> to vector<8x32xf32>
    %174 = arith.addf %172, %173 : vector<8x32xf32>
    %175 = arith.negf %174 : vector<8x32xf32>
    %176 = math.exp %175 : vector<8x32xf32>
    %cst_44 = arith.constant 1.000000e+00 : f32
    %177 = vector.broadcast %cst_44 : f32 to vector<8x32xf32>
    %178 = arith.addf %177, %176 : vector<8x32xf32>
    %179 = arith.divf %177, %178 : vector<8x32xf32>
    %180 = vector.extract_strided_slice %170 {offsets = [0, 32], sizes = [8, 32], strides = [1, 1]} : vector<8x96xf32> to vector<8x32xf32>
    %181 = vector.extract_strided_slice %171 {offsets = [0, 32], sizes = [8, 32], strides = [1, 1]} : vector<8x96xf32> to vector<8x32xf32>
    %182 = arith.addf %180, %181 : vector<8x32xf32>
    %183 = arith.negf %182 : vector<8x32xf32>
    %184 = math.exp %183 : vector<8x32xf32>
    %cst_45 = arith.constant 1.000000e+00 : f32
    %185 = vector.broadcast %cst_45 : f32 to vector<8x32xf32>
    %186 = arith.addf %185, %184 : vector<8x32xf32>
    %187 = arith.divf %185, %186 : vector<8x32xf32>
    %188 = vector.extract_strided_slice %170 {offsets = [0, 64], sizes = [8, 32], strides = [1, 1]} : vector<8x96xf32> to vector<8x32xf32>
    %189 = vector.extract_strided_slice %171 {offsets = [0, 64], sizes = [8, 32], strides = [1, 1]} : vector<8x96xf32> to vector<8x32xf32>
    %190 = arith.addf %189, %17 : vector<8x32xf32>
    %191 = arith.mulf %179, %190 : vector<8x32xf32>
    %192 = arith.addf %188, %191 : vector<8x32xf32>
    %193 = math.tanh %192 : vector<8x32xf32>
    %cst_46 = arith.constant 1.000000e+00 : f32
    %194 = vector.broadcast %cst_46 : f32 to vector<8x32xf32>
    %195 = arith.subf %194, %187 : vector<8x32xf32>
    %196 = arith.mulf %195, %193 : vector<8x32xf32>
    %197 = arith.mulf %187, %139 : vector<8x32xf32>
    %198 = arith.addf %196, %197 : vector<8x32xf32>
    %cst_47 = arith.constant dense<0.000000e+00> : vector<8x96xf32>
    %199 = tpu.matmul %139, %11, %cst_47 {dimension_numbers = #tpu.dot_dimension_numbers<[1], [0], [0], [1], [0, 0, 1, 1], [], []>} : vector<8x32xf32>, vector<32x96xf32>, vector<8x96xf32> -> vector<8x96xf32>
    %200 = arith.addf %199, %14 : vector<8x96xf32>
    %cst_48 = arith.constant dense<0.000000e+00> : vector<8x96xf32>
    %201 = tpu.matmul %169, %9, %cst_48 {dimension_numbers = #tpu.dot_dimension_numbers<[1], [0], [0], [1], [0, 0, 1, 1], [], []>} : vector<8x32xf32>, vector<32x96xf32>, vector<8x96xf32> -> vector<8x96xf32>
    %202 = vector.extract_strided_slice %200 {offsets = [0, 0], sizes = [8, 32], strides = [1, 1]} : vector<8x96xf32> to vector<8x32xf32>
    %203 = vector.extract_strided_slice %201 {offsets = [0, 0], sizes = [8, 32], strides = [1, 1]} : vector<8x96xf32> to vector<8x32xf32>
    %204 = arith.addf %202, %203 : vector<8x32xf32>
    %205 = arith.negf %204 : vector<8x32xf32>
    %206 = math.exp %205 : vector<8x32xf32>
    %cst_49 = arith.constant 1.000000e+00 : f32
    %207 = vector.broadcast %cst_49 : f32 to vector<8x32xf32>
    %208 = arith.addf %207, %206 : vector<8x32xf32>
    %209 = arith.divf %207, %208 : vector<8x32xf32>
    %210 = vector.extract_strided_slice %200 {offsets = [0, 32], sizes = [8, 32], strides = [1, 1]} : vector<8x96xf32> to vector<8x32xf32>
    %211 = vector.extract_strided_slice %201 {offsets = [0, 32], sizes = [8, 32], strides = [1, 1]} : vector<8x96xf32> to vector<8x32xf32>
    %212 = arith.addf %210, %211 : vector<8x32xf32>
    %213 = arith.negf %212 : vector<8x32xf32>
    %214 = math.exp %213 : vector<8x32xf32>
    %cst_50 = arith.constant 1.000000e+00 : f32
    %215 = vector.broadcast %cst_50 : f32 to vector<8x32xf32>
    %216 = arith.addf %215, %214 : vector<8x32xf32>
    %217 = arith.divf %215, %216 : vector<8x32xf32>
    %218 = vector.extract_strided_slice %200 {offsets = [0, 64], sizes = [8, 32], strides = [1, 1]} : vector<8x96xf32> to vector<8x32xf32>
    %219 = vector.extract_strided_slice %201 {offsets = [0, 64], sizes = [8, 32], strides = [1, 1]} : vector<8x96xf32> to vector<8x32xf32>
    %220 = arith.addf %219, %20 : vector<8x32xf32>
    %221 = arith.mulf %209, %220 : vector<8x32xf32>
    %222 = arith.addf %218, %221 : vector<8x32xf32>
    %223 = math.tanh %222 : vector<8x32xf32>
    %cst_51 = arith.constant 1.000000e+00 : f32
    %224 = vector.broadcast %cst_51 : f32 to vector<8x32xf32>
    %225 = arith.subf %224, %217 : vector<8x32xf32>
    %226 = arith.mulf %225, %223 : vector<8x32xf32>
    %227 = arith.mulf %217, %169 : vector<8x32xf32>
    %228 = arith.addf %226, %227 : vector<8x32xf32>
    %229 = vector.extract_strided_slice %5 {offsets = [32, 0], sizes = [8, 96], strides = [1, 1]} : vector<64x96xf32> to vector<8x96xf32>
    %cst_52 = arith.constant dense<0.000000e+00> : vector<8x96xf32>
    %230 = tpu.matmul %198, %7, %cst_52 {dimension_numbers = #tpu.dot_dimension_numbers<[1], [0], [0], [1], [0, 0, 1, 1], [], []>} : vector<8x32xf32>, vector<32x96xf32>, vector<8x96xf32> -> vector<8x96xf32>
    %231 = vector.extract_strided_slice %229 {offsets = [0, 0], sizes = [8, 32], strides = [1, 1]} : vector<8x96xf32> to vector<8x32xf32>
    %232 = vector.extract_strided_slice %230 {offsets = [0, 0], sizes = [8, 32], strides = [1, 1]} : vector<8x96xf32> to vector<8x32xf32>
    %233 = arith.addf %231, %232 : vector<8x32xf32>
    %234 = arith.negf %233 : vector<8x32xf32>
    %235 = math.exp %234 : vector<8x32xf32>
    %cst_53 = arith.constant 1.000000e+00 : f32
    %236 = vector.broadcast %cst_53 : f32 to vector<8x32xf32>
    %237 = arith.addf %236, %235 : vector<8x32xf32>
    %238 = arith.divf %236, %237 : vector<8x32xf32>
    %239 = vector.extract_strided_slice %229 {offsets = [0, 32], sizes = [8, 32], strides = [1, 1]} : vector<8x96xf32> to vector<8x32xf32>
    %240 = vector.extract_strided_slice %230 {offsets = [0, 32], sizes = [8, 32], strides = [1, 1]} : vector<8x96xf32> to vector<8x32xf32>
    %241 = arith.addf %239, %240 : vector<8x32xf32>
    %242 = arith.negf %241 : vector<8x32xf32>
    %243 = math.exp %242 : vector<8x32xf32>
    %cst_54 = arith.constant 1.000000e+00 : f32
    %244 = vector.broadcast %cst_54 : f32 to vector<8x32xf32>
    %245 = arith.addf %244, %243 : vector<8x32xf32>
    %246 = arith.divf %244, %245 : vector<8x32xf32>
    %247 = vector.extract_strided_slice %229 {offsets = [0, 64], sizes = [8, 32], strides = [1, 1]} : vector<8x96xf32> to vector<8x32xf32>
    %248 = vector.extract_strided_slice %230 {offsets = [0, 64], sizes = [8, 32], strides = [1, 1]} : vector<8x96xf32> to vector<8x32xf32>
    %249 = arith.addf %248, %17 : vector<8x32xf32>
    %250 = arith.mulf %238, %249 : vector<8x32xf32>
    %251 = arith.addf %247, %250 : vector<8x32xf32>
    %252 = math.tanh %251 : vector<8x32xf32>
    %cst_55 = arith.constant 1.000000e+00 : f32
    %253 = vector.broadcast %cst_55 : f32 to vector<8x32xf32>
    %254 = arith.subf %253, %246 : vector<8x32xf32>
    %255 = arith.mulf %254, %252 : vector<8x32xf32>
    %256 = arith.mulf %246, %198 : vector<8x32xf32>
    %257 = arith.addf %255, %256 : vector<8x32xf32>
    %cst_56 = arith.constant dense<0.000000e+00> : vector<8x96xf32>
    %258 = tpu.matmul %198, %11, %cst_56 {dimension_numbers = #tpu.dot_dimension_numbers<[1], [0], [0], [1], [0, 0, 1, 1], [], []>} : vector<8x32xf32>, vector<32x96xf32>, vector<8x96xf32> -> vector<8x96xf32>
    %259 = arith.addf %258, %14 : vector<8x96xf32>
    %cst_57 = arith.constant dense<0.000000e+00> : vector<8x96xf32>
    %260 = tpu.matmul %228, %9, %cst_57 {dimension_numbers = #tpu.dot_dimension_numbers<[1], [0], [0], [1], [0, 0, 1, 1], [], []>} : vector<8x32xf32>, vector<32x96xf32>, vector<8x96xf32> -> vector<8x96xf32>
    %261 = vector.extract_strided_slice %259 {offsets = [0, 0], sizes = [8, 32], strides = [1, 1]} : vector<8x96xf32> to vector<8x32xf32>
    %262 = vector.extract_strided_slice %260 {offsets = [0, 0], sizes = [8, 32], strides = [1, 1]} : vector<8x96xf32> to vector<8x32xf32>
    %263 = arith.addf %261, %262 : vector<8x32xf32>
    %264 = arith.negf %263 : vector<8x32xf32>
    %265 = math.exp %264 : vector<8x32xf32>
    %cst_58 = arith.constant 1.000000e+00 : f32
    %266 = vector.broadcast %cst_58 : f32 to vector<8x32xf32>
    %267 = arith.addf %266, %265 : vector<8x32xf32>
    %268 = arith.divf %266, %267 : vector<8x32xf32>
    %269 = vector.extract_strided_slice %259 {offsets = [0, 32], sizes = [8, 32], strides = [1, 1]} : vector<8x96xf32> to vector<8x32xf32>
    %270 = vector.extract_strided_slice %260 {offsets = [0, 32], sizes = [8, 32], strides = [1, 1]} : vector<8x96xf32> to vector<8x32xf32>
    %271 = arith.addf %269, %270 : vector<8x32xf32>
    %272 = arith.negf %271 : vector<8x32xf32>
    %273 = math.exp %272 : vector<8x32xf32>
    %cst_59 = arith.constant 1.000000e+00 : f32
    %274 = vector.broadcast %cst_59 : f32 to vector<8x32xf32>
    %275 = arith.addf %274, %273 : vector<8x32xf32>
    %276 = arith.divf %274, %275 : vector<8x32xf32>
    %277 = vector.extract_strided_slice %259 {offsets = [0, 64], sizes = [8, 32], strides = [1, 1]} : vector<8x96xf32> to vector<8x32xf32>
    %278 = vector.extract_strided_slice %260 {offsets = [0, 64], sizes = [8, 32], strides = [1, 1]} : vector<8x96xf32> to vector<8x32xf32>
    %279 = arith.addf %278, %20 : vector<8x32xf32>
    %280 = arith.mulf %268, %279 : vector<8x32xf32>
    %281 = arith.addf %277, %280 : vector<8x32xf32>
    %282 = math.tanh %281 : vector<8x32xf32>
    %cst_60 = arith.constant 1.000000e+00 : f32
    %283 = vector.broadcast %cst_60 : f32 to vector<8x32xf32>
    %284 = arith.subf %283, %276 : vector<8x32xf32>
    %285 = arith.mulf %284, %282 : vector<8x32xf32>
    %286 = arith.mulf %276, %228 : vector<8x32xf32>
    %287 = arith.addf %285, %286 : vector<8x32xf32>
    %288 = vector.extract_strided_slice %5 {offsets = [40, 0], sizes = [8, 96], strides = [1, 1]} : vector<64x96xf32> to vector<8x96xf32>
    %cst_61 = arith.constant dense<0.000000e+00> : vector<8x96xf32>
    %289 = tpu.matmul %257, %7, %cst_61 {dimension_numbers = #tpu.dot_dimension_numbers<[1], [0], [0], [1], [0, 0, 1, 1], [], []>} : vector<8x32xf32>, vector<32x96xf32>, vector<8x96xf32> -> vector<8x96xf32>
    %290 = vector.extract_strided_slice %288 {offsets = [0, 0], sizes = [8, 32], strides = [1, 1]} : vector<8x96xf32> to vector<8x32xf32>
    %291 = vector.extract_strided_slice %289 {offsets = [0, 0], sizes = [8, 32], strides = [1, 1]} : vector<8x96xf32> to vector<8x32xf32>
    %292 = arith.addf %290, %291 : vector<8x32xf32>
    %293 = arith.negf %292 : vector<8x32xf32>
    %294 = math.exp %293 : vector<8x32xf32>
    %cst_62 = arith.constant 1.000000e+00 : f32
    %295 = vector.broadcast %cst_62 : f32 to vector<8x32xf32>
    %296 = arith.addf %295, %294 : vector<8x32xf32>
    %297 = arith.divf %295, %296 : vector<8x32xf32>
    %298 = vector.extract_strided_slice %288 {offsets = [0, 32], sizes = [8, 32], strides = [1, 1]} : vector<8x96xf32> to vector<8x32xf32>
    %299 = vector.extract_strided_slice %289 {offsets = [0, 32], sizes = [8, 32], strides = [1, 1]} : vector<8x96xf32> to vector<8x32xf32>
    %300 = arith.addf %298, %299 : vector<8x32xf32>
    %301 = arith.negf %300 : vector<8x32xf32>
    %302 = math.exp %301 : vector<8x32xf32>
    %cst_63 = arith.constant 1.000000e+00 : f32
    %303 = vector.broadcast %cst_63 : f32 to vector<8x32xf32>
    %304 = arith.addf %303, %302 : vector<8x32xf32>
    %305 = arith.divf %303, %304 : vector<8x32xf32>
    %306 = vector.extract_strided_slice %288 {offsets = [0, 64], sizes = [8, 32], strides = [1, 1]} : vector<8x96xf32> to vector<8x32xf32>
    %307 = vector.extract_strided_slice %289 {offsets = [0, 64], sizes = [8, 32], strides = [1, 1]} : vector<8x96xf32> to vector<8x32xf32>
    %308 = arith.addf %307, %17 : vector<8x32xf32>
    %309 = arith.mulf %297, %308 : vector<8x32xf32>
    %310 = arith.addf %306, %309 : vector<8x32xf32>
    %311 = math.tanh %310 : vector<8x32xf32>
    %cst_64 = arith.constant 1.000000e+00 : f32
    %312 = vector.broadcast %cst_64 : f32 to vector<8x32xf32>
    %313 = arith.subf %312, %305 : vector<8x32xf32>
    %314 = arith.mulf %313, %311 : vector<8x32xf32>
    %315 = arith.mulf %305, %257 : vector<8x32xf32>
    %316 = arith.addf %314, %315 : vector<8x32xf32>
    %cst_65 = arith.constant dense<0.000000e+00> : vector<8x96xf32>
    %317 = tpu.matmul %257, %11, %cst_65 {dimension_numbers = #tpu.dot_dimension_numbers<[1], [0], [0], [1], [0, 0, 1, 1], [], []>} : vector<8x32xf32>, vector<32x96xf32>, vector<8x96xf32> -> vector<8x96xf32>
    %318 = arith.addf %317, %14 : vector<8x96xf32>
    %cst_66 = arith.constant dense<0.000000e+00> : vector<8x96xf32>
    %319 = tpu.matmul %287, %9, %cst_66 {dimension_numbers = #tpu.dot_dimension_numbers<[1], [0], [0], [1], [0, 0, 1, 1], [], []>} : vector<8x32xf32>, vector<32x96xf32>, vector<8x96xf32> -> vector<8x96xf32>
    %320 = vector.extract_strided_slice %318 {offsets = [0, 0], sizes = [8, 32], strides = [1, 1]} : vector<8x96xf32> to vector<8x32xf32>
    %321 = vector.extract_strided_slice %319 {offsets = [0, 0], sizes = [8, 32], strides = [1, 1]} : vector<8x96xf32> to vector<8x32xf32>
    %322 = arith.addf %320, %321 : vector<8x32xf32>
    %323 = arith.negf %322 : vector<8x32xf32>
    %324 = math.exp %323 : vector<8x32xf32>
    %cst_67 = arith.constant 1.000000e+00 : f32
    %325 = vector.broadcast %cst_67 : f32 to vector<8x32xf32>
    %326 = arith.addf %325, %324 : vector<8x32xf32>
    %327 = arith.divf %325, %326 : vector<8x32xf32>
    %328 = vector.extract_strided_slice %318 {offsets = [0, 32], sizes = [8, 32], strides = [1, 1]} : vector<8x96xf32> to vector<8x32xf32>
    %329 = vector.extract_strided_slice %319 {offsets = [0, 32], sizes = [8, 32], strides = [1, 1]} : vector<8x96xf32> to vector<8x32xf32>
    %330 = arith.addf %328, %329 : vector<8x32xf32>
    %331 = arith.negf %330 : vector<8x32xf32>
    %332 = math.exp %331 : vector<8x32xf32>
    %cst_68 = arith.constant 1.000000e+00 : f32
    %333 = vector.broadcast %cst_68 : f32 to vector<8x32xf32>
    %334 = arith.addf %333, %332 : vector<8x32xf32>
    %335 = arith.divf %333, %334 : vector<8x32xf32>
    %336 = vector.extract_strided_slice %318 {offsets = [0, 64], sizes = [8, 32], strides = [1, 1]} : vector<8x96xf32> to vector<8x32xf32>
    %337 = vector.extract_strided_slice %319 {offsets = [0, 64], sizes = [8, 32], strides = [1, 1]} : vector<8x96xf32> to vector<8x32xf32>
    %338 = arith.addf %337, %20 : vector<8x32xf32>
    %339 = arith.mulf %327, %338 : vector<8x32xf32>
    %340 = arith.addf %336, %339 : vector<8x32xf32>
    %341 = math.tanh %340 : vector<8x32xf32>
    %cst_69 = arith.constant 1.000000e+00 : f32
    %342 = vector.broadcast %cst_69 : f32 to vector<8x32xf32>
    %343 = arith.subf %342, %335 : vector<8x32xf32>
    %344 = arith.mulf %343, %341 : vector<8x32xf32>
    %345 = arith.mulf %335, %287 : vector<8x32xf32>
    %346 = arith.addf %344, %345 : vector<8x32xf32>
    %347 = vector.extract_strided_slice %5 {offsets = [48, 0], sizes = [8, 96], strides = [1, 1]} : vector<64x96xf32> to vector<8x96xf32>
    %cst_70 = arith.constant dense<0.000000e+00> : vector<8x96xf32>
    %348 = tpu.matmul %316, %7, %cst_70 {dimension_numbers = #tpu.dot_dimension_numbers<[1], [0], [0], [1], [0, 0, 1, 1], [], []>} : vector<8x32xf32>, vector<32x96xf32>, vector<8x96xf32> -> vector<8x96xf32>
    %349 = vector.extract_strided_slice %347 {offsets = [0, 0], sizes = [8, 32], strides = [1, 1]} : vector<8x96xf32> to vector<8x32xf32>
    %350 = vector.extract_strided_slice %348 {offsets = [0, 0], sizes = [8, 32], strides = [1, 1]} : vector<8x96xf32> to vector<8x32xf32>
    %351 = arith.addf %349, %350 : vector<8x32xf32>
    %352 = arith.negf %351 : vector<8x32xf32>
    %353 = math.exp %352 : vector<8x32xf32>
    %cst_71 = arith.constant 1.000000e+00 : f32
    %354 = vector.broadcast %cst_71 : f32 to vector<8x32xf32>
    %355 = arith.addf %354, %353 : vector<8x32xf32>
    %356 = arith.divf %354, %355 : vector<8x32xf32>
    %357 = vector.extract_strided_slice %347 {offsets = [0, 32], sizes = [8, 32], strides = [1, 1]} : vector<8x96xf32> to vector<8x32xf32>
    %358 = vector.extract_strided_slice %348 {offsets = [0, 32], sizes = [8, 32], strides = [1, 1]} : vector<8x96xf32> to vector<8x32xf32>
    %359 = arith.addf %357, %358 : vector<8x32xf32>
    %360 = arith.negf %359 : vector<8x32xf32>
    %361 = math.exp %360 : vector<8x32xf32>
    %cst_72 = arith.constant 1.000000e+00 : f32
    %362 = vector.broadcast %cst_72 : f32 to vector<8x32xf32>
    %363 = arith.addf %362, %361 : vector<8x32xf32>
    %364 = arith.divf %362, %363 : vector<8x32xf32>
    %365 = vector.extract_strided_slice %347 {offsets = [0, 64], sizes = [8, 32], strides = [1, 1]} : vector<8x96xf32> to vector<8x32xf32>
    %366 = vector.extract_strided_slice %348 {offsets = [0, 64], sizes = [8, 32], strides = [1, 1]} : vector<8x96xf32> to vector<8x32xf32>
    %367 = arith.addf %366, %17 : vector<8x32xf32>
    %368 = arith.mulf %356, %367 : vector<8x32xf32>
    %369 = arith.addf %365, %368 : vector<8x32xf32>
    %370 = math.tanh %369 : vector<8x32xf32>
    %cst_73 = arith.constant 1.000000e+00 : f32
    %371 = vector.broadcast %cst_73 : f32 to vector<8x32xf32>
    %372 = arith.subf %371, %364 : vector<8x32xf32>
    %373 = arith.mulf %372, %370 : vector<8x32xf32>
    %374 = arith.mulf %364, %316 : vector<8x32xf32>
    %375 = arith.addf %373, %374 : vector<8x32xf32>
    %cst_74 = arith.constant dense<0.000000e+00> : vector<8x96xf32>
    %376 = tpu.matmul %316, %11, %cst_74 {dimension_numbers = #tpu.dot_dimension_numbers<[1], [0], [0], [1], [0, 0, 1, 1], [], []>} : vector<8x32xf32>, vector<32x96xf32>, vector<8x96xf32> -> vector<8x96xf32>
    %377 = arith.addf %376, %14 : vector<8x96xf32>
    %cst_75 = arith.constant dense<0.000000e+00> : vector<8x96xf32>
    %378 = tpu.matmul %346, %9, %cst_75 {dimension_numbers = #tpu.dot_dimension_numbers<[1], [0], [0], [1], [0, 0, 1, 1], [], []>} : vector<8x32xf32>, vector<32x96xf32>, vector<8x96xf32> -> vector<8x96xf32>
    %379 = vector.extract_strided_slice %377 {offsets = [0, 0], sizes = [8, 32], strides = [1, 1]} : vector<8x96xf32> to vector<8x32xf32>
    %380 = vector.extract_strided_slice %378 {offsets = [0, 0], sizes = [8, 32], strides = [1, 1]} : vector<8x96xf32> to vector<8x32xf32>
    %381 = arith.addf %379, %380 : vector<8x32xf32>
    %382 = arith.negf %381 : vector<8x32xf32>
    %383 = math.exp %382 : vector<8x32xf32>
    %cst_76 = arith.constant 1.000000e+00 : f32
    %384 = vector.broadcast %cst_76 : f32 to vector<8x32xf32>
    %385 = arith.addf %384, %383 : vector<8x32xf32>
    %386 = arith.divf %384, %385 : vector<8x32xf32>
    %387 = vector.extract_strided_slice %377 {offsets = [0, 32], sizes = [8, 32], strides = [1, 1]} : vector<8x96xf32> to vector<8x32xf32>
    %388 = vector.extract_strided_slice %378 {offsets = [0, 32], sizes = [8, 32], strides = [1, 1]} : vector<8x96xf32> to vector<8x32xf32>
    %389 = arith.addf %387, %388 : vector<8x32xf32>
    %390 = arith.negf %389 : vector<8x32xf32>
    %391 = math.exp %390 : vector<8x32xf32>
    %cst_77 = arith.constant 1.000000e+00 : f32
    %392 = vector.broadcast %cst_77 : f32 to vector<8x32xf32>
    %393 = arith.addf %392, %391 : vector<8x32xf32>
    %394 = arith.divf %392, %393 : vector<8x32xf32>
    %395 = vector.extract_strided_slice %377 {offsets = [0, 64], sizes = [8, 32], strides = [1, 1]} : vector<8x96xf32> to vector<8x32xf32>
    %396 = vector.extract_strided_slice %378 {offsets = [0, 64], sizes = [8, 32], strides = [1, 1]} : vector<8x96xf32> to vector<8x32xf32>
    %397 = arith.addf %396, %20 : vector<8x32xf32>
    %398 = arith.mulf %386, %397 : vector<8x32xf32>
    %399 = arith.addf %395, %398 : vector<8x32xf32>
    %400 = math.tanh %399 : vector<8x32xf32>
    %cst_78 = arith.constant 1.000000e+00 : f32
    %401 = vector.broadcast %cst_78 : f32 to vector<8x32xf32>
    %402 = arith.subf %401, %394 : vector<8x32xf32>
    %403 = arith.mulf %402, %400 : vector<8x32xf32>
    %404 = arith.mulf %394, %346 : vector<8x32xf32>
    %405 = arith.addf %403, %404 : vector<8x32xf32>
    %406 = vector.extract_strided_slice %5 {offsets = [56, 0], sizes = [8, 96], strides = [1, 1]} : vector<64x96xf32> to vector<8x96xf32>
    %cst_79 = arith.constant dense<0.000000e+00> : vector<8x96xf32>
    %407 = tpu.matmul %375, %7, %cst_79 {dimension_numbers = #tpu.dot_dimension_numbers<[1], [0], [0], [1], [0, 0, 1, 1], [], []>} : vector<8x32xf32>, vector<32x96xf32>, vector<8x96xf32> -> vector<8x96xf32>
    %408 = vector.extract_strided_slice %406 {offsets = [0, 0], sizes = [8, 32], strides = [1, 1]} : vector<8x96xf32> to vector<8x32xf32>
    %409 = vector.extract_strided_slice %407 {offsets = [0, 0], sizes = [8, 32], strides = [1, 1]} : vector<8x96xf32> to vector<8x32xf32>
    %410 = arith.addf %408, %409 : vector<8x32xf32>
    %411 = arith.negf %410 : vector<8x32xf32>
    %412 = math.exp %411 : vector<8x32xf32>
    %cst_80 = arith.constant 1.000000e+00 : f32
    %413 = vector.broadcast %cst_80 : f32 to vector<8x32xf32>
    %414 = arith.addf %413, %412 : vector<8x32xf32>
    %415 = arith.divf %413, %414 : vector<8x32xf32>
    %416 = vector.extract_strided_slice %406 {offsets = [0, 32], sizes = [8, 32], strides = [1, 1]} : vector<8x96xf32> to vector<8x32xf32>
    %417 = vector.extract_strided_slice %407 {offsets = [0, 32], sizes = [8, 32], strides = [1, 1]} : vector<8x96xf32> to vector<8x32xf32>
    %418 = arith.addf %416, %417 : vector<8x32xf32>
    %419 = arith.negf %418 : vector<8x32xf32>
    %420 = math.exp %419 : vector<8x32xf32>
    %cst_81 = arith.constant 1.000000e+00 : f32
    %421 = vector.broadcast %cst_81 : f32 to vector<8x32xf32>
    %422 = arith.addf %421, %420 : vector<8x32xf32>
    %423 = arith.divf %421, %422 : vector<8x32xf32>
    %424 = vector.extract_strided_slice %406 {offsets = [0, 64], sizes = [8, 32], strides = [1, 1]} : vector<8x96xf32> to vector<8x32xf32>
    %425 = vector.extract_strided_slice %407 {offsets = [0, 64], sizes = [8, 32], strides = [1, 1]} : vector<8x96xf32> to vector<8x32xf32>
    %426 = arith.addf %425, %17 : vector<8x32xf32>
    %427 = arith.mulf %415, %426 : vector<8x32xf32>
    %428 = arith.addf %424, %427 : vector<8x32xf32>
    %429 = math.tanh %428 : vector<8x32xf32>
    %cst_82 = arith.constant 1.000000e+00 : f32
    %430 = vector.broadcast %cst_82 : f32 to vector<8x32xf32>
    %431 = arith.subf %430, %423 : vector<8x32xf32>
    %432 = arith.mulf %431, %429 : vector<8x32xf32>
    %433 = arith.mulf %423, %375 : vector<8x32xf32>
    %434 = arith.addf %432, %433 : vector<8x32xf32>
    %cst_83 = arith.constant dense<0.000000e+00> : vector<8x96xf32>
    %435 = tpu.matmul %375, %11, %cst_83 {dimension_numbers = #tpu.dot_dimension_numbers<[1], [0], [0], [1], [0, 0, 1, 1], [], []>} : vector<8x32xf32>, vector<32x96xf32>, vector<8x96xf32> -> vector<8x96xf32>
    %436 = arith.addf %435, %14 : vector<8x96xf32>
    %cst_84 = arith.constant dense<0.000000e+00> : vector<8x96xf32>
    %437 = tpu.matmul %405, %9, %cst_84 {dimension_numbers = #tpu.dot_dimension_numbers<[1], [0], [0], [1], [0, 0, 1, 1], [], []>} : vector<8x32xf32>, vector<32x96xf32>, vector<8x96xf32> -> vector<8x96xf32>
    %438 = vector.extract_strided_slice %436 {offsets = [0, 0], sizes = [8, 32], strides = [1, 1]} : vector<8x96xf32> to vector<8x32xf32>
    %439 = vector.extract_strided_slice %437 {offsets = [0, 0], sizes = [8, 32], strides = [1, 1]} : vector<8x96xf32> to vector<8x32xf32>
    %440 = arith.addf %438, %439 : vector<8x32xf32>
    %441 = arith.negf %440 : vector<8x32xf32>
    %442 = math.exp %441 : vector<8x32xf32>
    %cst_85 = arith.constant 1.000000e+00 : f32
    %443 = vector.broadcast %cst_85 : f32 to vector<8x32xf32>
    %444 = arith.addf %443, %442 : vector<8x32xf32>
    %445 = arith.divf %443, %444 : vector<8x32xf32>
    %446 = vector.extract_strided_slice %436 {offsets = [0, 32], sizes = [8, 32], strides = [1, 1]} : vector<8x96xf32> to vector<8x32xf32>
    %447 = vector.extract_strided_slice %437 {offsets = [0, 32], sizes = [8, 32], strides = [1, 1]} : vector<8x96xf32> to vector<8x32xf32>
    %448 = arith.addf %446, %447 : vector<8x32xf32>
    %449 = arith.negf %448 : vector<8x32xf32>
    %450 = math.exp %449 : vector<8x32xf32>
    %cst_86 = arith.constant 1.000000e+00 : f32
    %451 = vector.broadcast %cst_86 : f32 to vector<8x32xf32>
    %452 = arith.addf %451, %450 : vector<8x32xf32>
    %453 = arith.divf %451, %452 : vector<8x32xf32>
    %454 = vector.extract_strided_slice %436 {offsets = [0, 64], sizes = [8, 32], strides = [1, 1]} : vector<8x96xf32> to vector<8x32xf32>
    %455 = vector.extract_strided_slice %437 {offsets = [0, 64], sizes = [8, 32], strides = [1, 1]} : vector<8x96xf32> to vector<8x32xf32>
    %456 = arith.addf %455, %20 : vector<8x32xf32>
    %457 = arith.mulf %445, %456 : vector<8x32xf32>
    %458 = arith.addf %454, %457 : vector<8x32xf32>
    %459 = math.tanh %458 : vector<8x32xf32>
    %cst_87 = arith.constant 1.000000e+00 : f32
    %460 = vector.broadcast %cst_87 : f32 to vector<8x32xf32>
    %461 = arith.subf %460, %453 : vector<8x32xf32>
    %462 = arith.mulf %461, %459 : vector<8x32xf32>
    %463 = arith.mulf %453, %405 : vector<8x32xf32>
    %464 = arith.addf %462, %463 : vector<8x32xf32>
    %cst_88 = arith.constant dense<0.000000e+00> : vector<8x96xf32>
    %465 = tpu.matmul %434, %11, %cst_88 {dimension_numbers = #tpu.dot_dimension_numbers<[1], [0], [0], [1], [0, 0, 1, 1], [], []>} : vector<8x32xf32>, vector<32x96xf32>, vector<8x96xf32> -> vector<8x96xf32>
    %466 = arith.addf %465, %14 : vector<8x96xf32>
    %cst_89 = arith.constant dense<0.000000e+00> : vector<8x96xf32>
    %467 = tpu.matmul %464, %9, %cst_89 {dimension_numbers = #tpu.dot_dimension_numbers<[1], [0], [0], [1], [0, 0, 1, 1], [], []>} : vector<8x32xf32>, vector<32x96xf32>, vector<8x96xf32> -> vector<8x96xf32>
    %468 = vector.extract_strided_slice %466 {offsets = [0, 0], sizes = [8, 32], strides = [1, 1]} : vector<8x96xf32> to vector<8x32xf32>
    %469 = vector.extract_strided_slice %467 {offsets = [0, 0], sizes = [8, 32], strides = [1, 1]} : vector<8x96xf32> to vector<8x32xf32>
    %470 = arith.addf %468, %469 : vector<8x32xf32>
    %471 = arith.negf %470 : vector<8x32xf32>
    %472 = math.exp %471 : vector<8x32xf32>
    %cst_90 = arith.constant 1.000000e+00 : f32
    %473 = vector.broadcast %cst_90 : f32 to vector<8x32xf32>
    %474 = arith.addf %473, %472 : vector<8x32xf32>
    %475 = arith.divf %473, %474 : vector<8x32xf32>
    %476 = vector.extract_strided_slice %466 {offsets = [0, 32], sizes = [8, 32], strides = [1, 1]} : vector<8x96xf32> to vector<8x32xf32>
    %477 = vector.extract_strided_slice %467 {offsets = [0, 32], sizes = [8, 32], strides = [1, 1]} : vector<8x96xf32> to vector<8x32xf32>
    %478 = arith.addf %476, %477 : vector<8x32xf32>
    %479 = arith.negf %478 : vector<8x32xf32>
    %480 = math.exp %479 : vector<8x32xf32>
    %cst_91 = arith.constant 1.000000e+00 : f32
    %481 = vector.broadcast %cst_91 : f32 to vector<8x32xf32>
    %482 = arith.addf %481, %480 : vector<8x32xf32>
    %483 = arith.divf %481, %482 : vector<8x32xf32>
    %484 = vector.extract_strided_slice %466 {offsets = [0, 64], sizes = [8, 32], strides = [1, 1]} : vector<8x96xf32> to vector<8x32xf32>
    %485 = vector.extract_strided_slice %467 {offsets = [0, 64], sizes = [8, 32], strides = [1, 1]} : vector<8x96xf32> to vector<8x32xf32>
    %486 = arith.addf %485, %20 : vector<8x32xf32>
    %487 = arith.mulf %475, %486 : vector<8x32xf32>
    %488 = arith.addf %484, %487 : vector<8x32xf32>
    %489 = math.tanh %488 : vector<8x32xf32>
    %cst_92 = arith.constant 1.000000e+00 : f32
    %490 = vector.broadcast %cst_92 : f32 to vector<8x32xf32>
    %491 = arith.subf %490, %483 : vector<8x32xf32>
    %492 = arith.mulf %491, %489 : vector<8x32xf32>
    %493 = arith.mulf %483, %464 : vector<8x32xf32>
    %494 = arith.addf %492, %493 : vector<8x32xf32>
    %c0_93 = arith.constant 0 : index
    %c0_94 = arith.constant 0 : index
    %495 = vector.load %arg6[%c0_93, %c0_94] : memref<33x1xf32, #tpu.memory_space<vmem>>, vector<32x1xf32>
    %cst_95 = arith.constant dense<0.000000e+00> : vector<8x1xf32>
    %496 = tpu.matmul %494, %495, %cst_95 {dimension_numbers = #tpu.dot_dimension_numbers<[1], [0], [0], [1], [0, 0, 1, 1], [], []>} : vector<8x32xf32>, vector<32x1xf32>, vector<8x1xf32> -> vector<8x1xf32>
    %c32 = arith.constant 32 : index
    %c0_96 = arith.constant 0 : index
    %497 = vector.load %arg6[%c32, %c0_96] : memref<33x1xf32, #tpu.memory_space<vmem>>, vector<1x1xf32>
    %498 = vector.broadcast %497 : vector<1x1xf32> to vector<8x1xf32>
    %499 = arith.addf %496, %498 : vector<8x1xf32>
    %500 = vector.extract_strided_slice %499 {offsets = [0, 0], sizes = [2, 1], strides = [1, 1]} : vector<8x1xf32> to vector<2x1xf32>
    %c0_97 = arith.constant 0 : index
    %c0_98 = arith.constant 0 : index
    %501 = vector.load %arg7[%c0_97, %c0_98] : memref<2x1xf32, #tpu.memory_space<vmem>>, vector<2x1xf32>
    tpu.vector_store %arg7[%c0_97, %c0_98], %500 {strides = array<i32>} : memref<2x1xf32, #tpu.memory_space<vmem>>, vector<2x1xf32>,
    return
  }
}

</mosaic_0001>

<llo_original>
// kernel: stock_gru_forward.1
$region0: #{stock_gru_forward.1}
  #allocation0 [shape = 'u32[]', space=smem, size = 0x4, offset = 0x4, fixed_abs, tag = 'smem constant byte address 0x4 - core index']
  #allocation1 [shape = 'u32[72,128]{1,0:T(1,128)}', space=vmem, size = 0x9000, scoped, tag = 'internal scratch']
  %s0 = inlined_call_operand.vmem [shape: f32[64,4], index: 0, kind: input, shape index: {}]
  %s1 = inlined_call_operand.vmem [shape: f32[4,96], index: 1, kind: input, shape index: {}]
  %s2 = inlined_call_operand.vmem [shape: f32[1,32,96], index: 2, kind: input, shape index: {}]
  %s3 = inlined_call_operand.vmem [shape: f32[2,32,96], index: 3, kind: input, shape index: {}]
  %s4 = inlined_call_operand.vmem [shape: f32[2,96], index: 4, kind: input, shape index: {}]
  %s5 = inlined_call_operand.vmem [shape: f32[2,32], index: 5, kind: input, shape index: {}]
  %s6 = inlined_call_operand.vmem [shape: f32[33,1], index: 6, kind: input, shape index: {}]
  %s7 = inlined_call_operand.vmem [shape: f32[2,1], index: 7, kind: output, shape index: {}]
  %s8 = sld [smem:[#allocation0]]
  $region38: #{stock_gru_forward.1} parent=0
    _
  %s10 = ssub.s32 1, %s8
  %s11 = scalar_select 0, %s10, %s8
  // Predicated region
  $region2: #{stock_gru_forward.1} parent=0 // pred_check
    _
  $region3: #{stock_gru_forward.1} parent=0 // pred_check_branch
    %13 = sbr.rel (0) target = $region5
  $region4: #{stock_gru_forward.1} parent=0 // pred_region
    _
  $region5: #{stock_gru_forward.1} parent=0 // pred_fallthru
    _
  // Predicated region
  $region6: #{stock_gru_forward.1} parent=0 // pred_check
    _
  $region7: #{stock_gru_forward.1} parent=0 // pred_check_branch
    %15 = sbr.rel (0) target = $region9
  $region8: #{stock_gru_forward.1} parent=0 // pred_region
    _
  $region9: #{stock_gru_forward.1} parent=0 // pred_fallthru
    _
  // Predicated region
  $region10: #{stock_gru_forward.1} parent=0 // pred_check
    _
  $region11: #{stock_gru_forward.1} parent=0 // pred_check_branch
    %17 = sbr.rel (0) target = $region13
  $region12: #{stock_gru_forward.1} parent=0 // pred_region
    _
  $region13: #{stock_gru_forward.1} parent=0 // pred_fallthru
    _
  // Predicated region
  $region14: #{stock_gru_forward.1} parent=0 // pred_check
    _
  $region15: #{stock_gru_forward.1} parent=0 // pred_check_branch
    %19 = sbr.rel (0) target = $region17
  $region16: #{stock_gru_forward.1} parent=0 // pred_region
    _
  $region17: #{stock_gru_forward.1} parent=0 // pred_fallthru
    _
  // Predicated region
  $region18: #{stock_gru_forward.1} parent=0 // pred_check
    _
  $region19: #{stock_gru_forward.1} parent=0 // pred_check_branch
    %21 = sbr.rel (0) target = $region21
  $region20: #{stock_gru_forward.1} parent=0 // pred_region
    _
  $region21: #{stock_gru_forward.1} parent=0 // pred_fallthru
    _
  // Predicated region
  $region22: #{stock_gru_forward.1} parent=0 // pred_check
    _
  $region23: #{stock_gru_forward.1} parent=0 // pred_check_branch
    %23 = sbr.rel (0) target = $region25
  $region24: #{stock_gru_forward.1} parent=0 // pred_region
    _
  $region25: #{stock_gru_forward.1} parent=0 // pred_fallthru
    _
  // Predicated region
  $region26: #{stock_gru_forward.1} parent=0 // pred_check
    _
  $region27: #{stock_gru_forward.1} parent=0 // pred_check_branch
    %25 = sbr.rel (0) target = $region29
  $region28: #{stock_gru_forward.1} parent=0 // pred_region
    _
  $region29: #{stock_gru_forward.1} parent=0 // pred_fallthru
    _
  %v26 = vld [vmem:[%s0] sm:$0xff]
  %v27 = vld [vmem:[%s0 + $0x8] sm:$0xff]
  %v28 = vld [vmem:[%s0 + $0x10] sm:$0xff]
  %v29 = vld [vmem:[%s0 + $0x18] sm:$0xff]
  %v30 = vld [vmem:[%s0 + $0x20] sm:$0xff]
  %v31 = vld [vmem:[%s0 + $0x28] sm:$0xff]
  %v32 = vld [vmem:[%s0 + $0x30] sm:$0xff]
  %v33 = vld [vmem:[%s0 + $0x38] sm:$0xff]
  %v34 = vld [vmem:[%s1] sm:$0xf]
  %v35 = vld [vmem:[%s4] sm:$0x1]
  %v36 = vperm.slane %v35, 0
  %vm37 = vcmask 31744
  %v39 = vsel %vm37, %v26, 0
  %v42 = vsel %vm37, %v27, 0
  %v45 = vsel %vm37, %v28, 0
  %v48 = vsel %vm37, %v29, 0
  %v51 = vsel %vm37, %v30, 0
  %v54 = vsel %vm37, %v31, 0
  %v57 = vsel %vm37, %v32, 0
  %v60 = vsel %vm37, %v33, 0
  %vm62 = vcmask 1043456
  %v64 = vsel %vm62, %v34, 0
  %66 = vmatpush.msra.mxu0 0.0
  %67 = vmatpush.msra.mxu0 0.0
  %68 = vmatpush.msra.mxu0 0.0
  %69 = vmatpush.msra.mxu0 0.0
  %70 = vmatpush.msra.mxu0 0.0
  %71 = vmatpush.msra.mxu0 0.0
  %72 = vmatpush.msra.mxu0 0.0
  %73 = vmatpush.msra.mxu0 0.0
  %74 = vmatpush.msra.mxu0 0.0
  %75 = vmatpush.msra.mxu0 0.0
  %76 = vmatpush.msra.mxu0 0.0
  %77 = vmatpush.msra.mxu0 0.0
  %78 = vmatpush.msra.mxu0 0.0
  %79 = vmatpush.msra.mxu0 0.0
  %80 = vmatpush.msra.mxu0 0.0
  %81 = vmatpush.msra.mxu0 %v64
  %82 = vmatmul.f32.gmra.mxu0 %v39
  %v83 = vpop.f32.mrf.mxu0
  %v84 = vadd.f32 %v36, %v83
  %85 = vmatmul.f32.gmra.mxu0 %v42
  %v86 = vpop.f32.mrf.mxu0
  %v87 = vadd.f32 %v36, %v86
  %88 = vmatmul.f32.gmra.mxu0 %v45
  %v89 = vpop.f32.mrf.mxu0
  %v90 = vadd.f32 %v36, %v89
  %91 = vmatmul.f32.gmra.mxu0 %v48
  %v92 = vpop.f32.mrf.mxu0
  %v93 = vadd.f32 %v36, %v92
  %94 = vmatmul.f32.gmra.mxu0 %v51
  %v95 = vpop.f32.mrf.mxu0
  %v96 = vadd.f32 %v36, %v95
  %97 = vmatmul.f32.gmra.mxu0 %v54
  %v98 = vpop.f32.mrf.mxu0
  %v99 = vadd.f32 %v36, %v98
  %100 = vmatmul.f32.gmra.mxu0 %v57
  %v101 = vpop.f32.mrf.mxu0
  %v102 = vadd.f32 %v36, %v101
  %103 = vmatmul.f32.gmra.mxu0 %v60
  %v104 = vpop.f32.mrf.mxu0
  %v105 = vadd.f32 %v36, %v104
  %106 = vdwg.mxu0
  %v107 = vld [vmem:[%s3] sm:$0xff]
  %v108 = vld [vmem:[%s3 + $0x8] sm:$0xff]
  %v109 = vld [vmem:[%s3 + $0x10] sm:$0xff]
  %v110 = vld [vmem:[%s3 + $0x18] sm:$0xff]
  %s111 = scalar_lea.vmem %s3, 32
  %v112 = vld [vmem:[%s111] sm:$0xff]
  %v113 = vld [vmem:[%s111 + $0x8] sm:$0xff]
  %v114 = vld [vmem:[%s111 + $0x10] sm:$0xff]
  %v115 = vld [vmem:[%s111 + $0x18] sm:$0xff]
  %v116 = vld [vmem:[%s2] sm:$0xff]
  %v117 = vld [vmem:[%s2 + $0x8] sm:$0xff]
  %v118 = vld [vmem:[%s2 + $0x10] sm:$0xff]
  %v119 = vld [vmem:[%s2 + $0x18] sm:$0xff]
  %v120 = vld [vmem:[%s4 + $0x1] sm:$0x1]
  %v121 = vperm.slane %v120, 0
  %v122 = vld [vmem:[%s5] sm:$0x1]
  %v123 = vperm.slane %v122, 0
  %v124 = vld [vmem:[%s5 + $0x1] sm:$0x1]
  %v125 = vperm.slane %v124, 0
  %vm126 = vcmask 261120
  %v128 = vsel %vm126, 0.0, 0
  %130 = vmatpush.msra.mxu0 0.0
  %131 = vmatpush.msra.mxu0 0.0
  %132 = vmatpush.msra.mxu0 0.0
  %133 = vmatpush.msra.mxu0 0.0
  %134 = vmatpush.msra.mxu0 0.0
  %135 = vmatpush.msra.mxu0 0.0
  %136 = vmatpush.msra.mxu0 0.0
  %137 = vmatpush.msra.mxu0 0.0
  %138 = vmatpush.msra.mxu0 0.0
  %139 = vmatpush.msra.mxu0 0.0
  %140 = vmatpush.msra.mxu0 0.0
  %141 = vmatpush.msra.mxu0 0.0
  %142 = vmatpush.msra.mxu0 %v110
  %143 = vmatpush.msra.mxu0 %v109
  %144 = vmatpush.msra.mxu0 %v108
  %145 = vmatpush.msra.mxu0 %v107
  %146 = vmatmul.f32.gmra.mxu0 %v128
  %v147 = vpop.f32.mrf.mxu0
  %v148 = vadd.f32 0.0, %v147
  %149 = vdwg.mxu0
  %v150 = vadd.f32 %v84, %v148
  %v151 = vxor.u32 %v150, 2147483648
  %v152 = vmul.f32 %v151, 1.442695
  %v153 = vpow.pop %v152
  %v154 = vadd.f32 %v153, 1.0
  %v155 = vrcp.pop %v154
  %v156 = vmul.f32 %v154, %v155
  %v157 = vsub.f32 1.0, %v156
  %v158 = vmul.f32 %v155, %v157
  %v159 = vadd.f32 %v155, %v158
  %vm160 = vweird.f32 %v154
  %vm161 = vweird.f32 %v155
  %vm162 = vmor %vm160, %vm161
  %v163 = vsel %vm162, %v155, %v159
  %v164 = vand.u32 2147483647, %v154
  %vm165 = vcmp.eq.f32.partialorder %v164, 8.507059e+37
  %v166 = vand.u32 %v154, 2147483648
  %v167 = vor.u32 1.1754944e-38, %v166
  %v168 = vsel %vm165, %v167, %v163
  %v169 = vmul.f32 1.0, %v168
  %171 = vrot.lane.b32.xlu0 %v123, 64
  %v172 = vpop.permute.xlu0 %171
  %v174 = vadd.f32 %v148, %v172
  %176 = vrot.lane.b32.xlu0 %v174, 64
  %v177 = vpop.permute.xlu0 %176
  %v179 = vmul.f32 %v169, %v177
  %181 = vrot.lane.b32.xlu0 %v179, 64
  %v182 = vpop.permute.xlu0 %181
  %v184 = vadd.f32 %v84, %v182
  %v185 = vtanh.pop %v184
  %v186 = vsub.f32 1.0, %v169
  %188 = vrot.lane.b32.xlu0 %v185, 96
  %v189 = vpop.permute.xlu0 %188
  %v191 = vmul.f32 %v186, %v189
  %v192 = vmul.f32 %v169, 0.0
  %v193 = vadd.f32 %v191, %v192
  %195 = vrot.lane.b32.xlu0 %v193, 96
  %v196 = vpop.permute.xlu0 %195
  %v197 = vsel %vm126, %v196, 0
  %199 = vmatpush.msra.mxu0 0.0
  %200 = vmatpush.msra.mxu0 0.0
  %201 = vmatpush.msra.mxu0 0.0
  %202 = vmatpush.msra.mxu0 0.0
  %203 = vmatpush.msra.mxu0 0.0
  %204 = vmatpush.msra.mxu0 0.0
  %205 = vmatpush.msra.mxu0 0.0
  %206 = vmatpush.msra.mxu0 0.0
  %207 = vmatpush.msra.mxu0 0.0
  %208 = vmatpush.msra.mxu0 0.0
  %209 = vmatpush.msra.mxu0 0.0
  %210 = vmatpush.msra.mxu0 0.0
  %211 = vmatpush.msra.mxu0 %v110
  %212 = vmatpush.msra.mxu0 %v109
  %213 = vmatpush.msra.mxu0 %v108
  %214 = vmatpush.msra.mxu0 %v107
  %215 = vmatmul.f32.gmra.mxu0 %v197
  %v216 = vpop.f32.mrf.mxu0
  %v217 = vadd.f32 0.0, %v216
  %218 = vdwg.mxu0
  %v219 = vadd.f32 %v87, %v217
  %v220 = vxor.u32 %v219, 2147483648
  %v221 = vmul.f32 %v220, 1.442695
  %v222 = vpow.pop %v221
  %v223 = vadd.f32 %v222, 1.0
  %v224 = vrcp.pop %v223
  %v225 = vmul.f32 %v223, %v224
  %v226 = vsub.f32 1.0, %v225
  %v227 = vmul.f32 %v224, %v226
  %v228 = vadd.f32 %v224, %v227
  %vm229 = vweird.f32 %v223
  %vm230 = vweird.f32 %v224
  %vm231 = vmor %vm229, %vm230
  %v232 = vsel %vm231, %v224, %v228
  %v233 = vand.u32 2147483647, %v223
  %vm234 = vcmp.eq.f32.partialorder %v233, 8.507059e+37
  %v235 = vand.u32 %v223, 2147483648
  %v236 = vor.u32 1.1754944e-38, %v235
  %v237 = vsel %vm234, %v236, %v232
  %v238 = vmul.f32 1.0, %v237
  %v239 = vadd.f32 %v217, %v172
  %241 = vrot.lane.b32.xlu0 %v239, 64
  %v242 = vpop.permute.xlu0 %241
  %v244 = vmul.f32 %v238, %v242
  %246 = vrot.lane.b32.xlu0 %v244, 64
  %v247 = vpop.permute.xlu0 %246
  %v249 = vadd.f32 %v87, %v247
  %v250 = vtanh.pop %v249
  %v251 = vsub.f32 1.0, %v238
  %253 = vrot.lane.b32.xlu0 %v250, 96
  %v254 = vpop.permute.xlu0 %253
  %v256 = vmul.f32 %v251, %v254
  %v257 = vmul.f32 %v238, %v193
  %v258 = vadd.f32 %v256, %v257
  %259 = vmatpush.msra.mxu0 0.0
  %260 = vmatpush.msra.mxu0 0.0
  %261 = vmatpush.msra.mxu0 0.0
  %262 = vmatpush.msra.mxu0 0.0
  %263 = vmatpush.msra.mxu0 0.0
  %264 = vmatpush.msra.mxu0 0.0
  %265 = vmatpush.msra.mxu0 0.0
  %266 = vmatpush.msra.mxu0 0.0
  %267 = vmatpush.msra.mxu0 0.0
  %268 = vmatpush.msra.mxu0 0.0
  %269 = vmatpush.msra.mxu0 0.0
  %270 = vmatpush.msra.mxu0 0.0
  %271 = vmatpush.msra.mxu0 %v119
  %272 = vmatpush.msra.mxu0 %v118
  %273 = vmatpush.msra.mxu0 %v117
  %274 = vmatpush.msra.mxu0 %v116
  %275 = vmatmul.f32.gmra.mxu0 %v197
  %v276 = vpop.f32.mrf.mxu0
  %v277 = vadd.f32 %v121, %v276
  %278 = vdwg.mxu0
  %279 = vmatpush.msra.mxu0 0.0
  %280 = vmatpush.msra.mxu0 0.0
  %281 = vmatpush.msra.mxu0 0.0
  %282 = vmatpush.msra.mxu0 0.0
  %283 = vmatpush.msra.mxu0 0.0
  %284 = vmatpush.msra.mxu0 0.0
  %285 = vmatpush.msra.mxu0 0.0
  %286 = vmatpush.msra.mxu0 0.0
  %287 = vmatpush.msra.mxu0 0.0
  %288 = vmatpush.msra.mxu0 0.0
  %289 = vmatpush.msra.mxu0 0.0
  %290 = vmatpush.msra.mxu0 0.0
  %291 = vmatpush.msra.mxu0 %v115
  %292 = vmatpush.msra.mxu0 %v114
  %293 = vmatpush.msra.mxu0 %v113
  %294 = vmatpush.msra.mxu0 %v112
  %295 = vmatmul.f32.gmra.mxu0 %v128
  %v296 = vpop.f32.mrf.mxu0
  %v297 = vadd.f32 0.0, %v296
  %298 = vdwg.mxu0
  %v299 = vadd.f32 %v277, %v297
  %v300 = vxor.u32 %v299, 2147483648
  %v301 = vmul.f32 %v300, 1.442695
  %v302 = vpow.pop %v301
  %v303 = vadd.f32 %v302, 1.0
  %v304 = vrcp.pop %v303
  %v305 = vmul.f32 %v303, %v304
  %v306 = vsub.f32 1.0, %v305
  %v307 = vmul.f32 %v304, %v306
  %v308 = vadd.f32 %v304, %v307
  %vm309 = vweird.f32 %v303
  %vm310 = vweird.f32 %v304
  %vm311 = vmor %vm309, %vm310
  %v312 = vsel %vm311, %v304, %v308
  %v313 = vand.u32 2147483647, %v303
  %vm314 = vcmp.eq.f32.partialorder %v313, 8.507059e+37
  %v315 = vand.u32 %v303, 2147483648
  %v316 = vor.u32 1.1754944e-38, %v315
  %v317 = vsel %vm314, %v316, %v312
  %v318 = vmul.f32 1.0, %v317
  %320 = vrot.lane.b32.xlu0 %v125, 64
  %v321 = vpop.permute.xlu0 %320
  %v323 = vadd.f32 %v297, %v321
  %325 = vrot.lane.b32.xlu0 %v323, 64
  %v326 = vpop.permute.xlu0 %325
  %v328 = vmul.f32 %v318, %v326
  %330 = vrot.lane.b32.xlu0 %v328, 64
  %v331 = vpop.permute.xlu0 %330
  %v333 = vadd.f32 %v277, %v331
  %v334 = vtanh.pop %v333
  %v335 = vsub.f32 1.0, %v318
  %337 = vrot.lane.b32.xlu0 %v334, 96
  %v338 = vpop.permute.xlu0 %337
  %v340 = vmul.f32 %v335, %v338
  %v341 = vmul.f32 %v318, 0.0
  %v342 = vadd.f32 %v340, %v341
  %344 = vrot.lane.b32.xlu0 %v258, 96
  %v345 = vpop.permute.xlu0 %344
  %v346 = vsel %vm126, %v345, 0
  %348 = vmatpush.msra.mxu0 0.0
  %349 = vmatpush.msra.mxu0 0.0
  %350 = vmatpush.msra.mxu0 0.0
  %351 = vmatpush.msra.mxu0 0.0
  %352 = vmatpush.msra.mxu0 0.0
  %353 = vmatpush.msra.mxu0 0.0
  %354 = vmatpush.msra.mxu0 0.0
  %355 = vmatpush.msra.mxu0 0.0
  %356 = vmatpush.msra.mxu0 0.0
  %357 = vmatpush.msra.mxu0 0.0
  %358 = vmatpush.msra.mxu0 0.0
  %359 = vmatpush.msra.mxu0 0.0
  %360 = vmatpush.msra.mxu0 %v110
  %361 = vmatpush.msra.mxu0 %v109
  %362 = vmatpush.msra.mxu0 %v108
  %363 = vmatpush.msra.mxu0 %v107
  %364 = vmatmul.f32.gmra.mxu0 %v346
  %v365 = vpop.f32.mrf.mxu0
  %v366 = vadd.f32 0.0, %v365
  %367 = vdwg.mxu0
  %v368 = vadd.f32 %v90, %v366
  %v369 = vxor.u32 %v368, 2147483648
  %v370 = vmul.f32 %v369, 1.442695
  %v371 = vpow.pop %v370
  %v372 = vadd.f32 %v371, 1.0
  %v373 = vrcp.pop %v372
  %v374 = vmul.f32 %v372, %v373
  %v375 = vsub.f32 1.0, %v374
  %v376 = vmul.f32 %v373, %v375
  %v377 = vadd.f32 %v373, %v376
  %vm378 = vweird.f32 %v372
  %vm379 = vweird.f32 %v373
  %vm380 = vmor %vm378, %vm379
  %v381 = vsel %vm380, %v373, %v377
  %v382 = vand.u32 2147483647, %v372
  %vm383 = vcmp.eq.f32.partialorder %v382, 8.507059e+37
  %v384 = vand.u32 %v372, 2147483648
  %v385 = vor.u32 1.1754944e-38, %v384
  %v386 = vsel %vm383, %v385, %v381
  %v387 = vmul.f32 1.0, %v386
  %v388 = vadd.f32 %v366, %v172
  %390 = vrot.lane.b32.xlu0 %v388, 64
  %v391 = vpop.permute.xlu0 %390
  %v393 = vmul.f32 %v387, %v391
  %395 = vrot.lane.b32.xlu0 %v393, 64
  %v396 = vpop.permute.xlu0 %395
  %v398 = vadd.f32 %v90, %v396
  %v399 = vtanh.pop %v398
  %v400 = vsub.f32 1.0, %v387
  %402 = vrot.lane.b32.xlu0 %v399, 96
  %v403 = vpop.permute.xlu0 %402
  %v405 = vmul.f32 %v400, %v403
  %v406 = vmul.f32 %v387, %v258
  %v407 = vadd.f32 %v405, %v406
  %408 = vmatpush.msra.mxu0 0.0
  %409 = vmatpush.msra.mxu0 0.0
  %410 = vmatpush.msra.mxu0 0.0
  %411 = vmatpush.msra.mxu0 0.0
  %412 = vmatpush.msra.mxu0 0.0
  %413 = vmatpush.msra.mxu0 0.0
  %414 = vmatpush.msra.mxu0 0.0
  %415 = vmatpush.msra.mxu0 0.0
  %416 = vmatpush.msra.mxu0 0.0
  %417 = vmatpush.msra.mxu0 0.0
  %418 = vmatpush.msra.mxu0 0.0
  %419 = vmatpush.msra.mxu0 0.0
  %420 = vmatpush.msra.mxu0 %v119
  %421 = vmatpush.msra.mxu0 %v118
  %422 = vmatpush.msra.mxu0 %v117
  %423 = vmatpush.msra.mxu0 %v116
  %424 = vmatmul.f32.gmra.mxu0 %v346
  %v425 = vpop.f32.mrf.mxu0
  %v426 = vadd.f32 %v121, %v425
  %427 = vdwg.mxu0
  %429 = vrot.lane.b32.xlu0 %v342, 96
  %v430 = vpop.permute.xlu0 %429
  %v431 = vsel %vm126, %v430, 0
  %433 = vmatpush.msra.mxu0 0.0
  %434 = vmatpush.msra.mxu0 0.0
  %435 = vmatpush.msra.mxu0 0.0
  %436 = vmatpush.msra.mxu0 0.0
  %437 = vmatpush.msra.mxu0 0.0
  %438 = vmatpush.msra.mxu0 0.0
  %439 = vmatpush.msra.mxu0 0.0
  %440 = vmatpush.msra.mxu0 0.0
  %441 = vmatpush.msra.mxu0 0.0
  %442 = vmatpush.msra.mxu0 0.0
  %443 = vmatpush.msra.mxu0 0.0
  %444 = vmatpush.msra.mxu0 0.0
  %445 = vmatpush.msra.mxu0 %v115
  %446 = vmatpush.msra.mxu0 %v114
  %447 = vmatpush.msra.mxu0 %v113
  %448 = vmatpush.msra.mxu0 %v112
  %449 = vmatmul.f32.gmra.mxu0 %v431
  %v450 = vpop.f32.mrf.mxu0
  %v451 = vadd.f32 0.0, %v450
  %452 = vdwg.mxu0
  %v453 = vadd.f32 %v426, %v451
  %v454 = vxor.u32 %v453, 2147483648
  %v455 = vmul.f32 %v454, 1.442695
  %v456 = vpow.pop %v455
  %v457 = vadd.f32 %v456, 1.0
  %v458 = vrcp.pop %v457
  %v459 = vmul.f32 %v457, %v458
  %v460 = vsub.f32 1.0, %v459
  %v461 = vmul.f32 %v458, %v460
  %v462 = vadd.f32 %v458, %v461
  %vm463 = vweird.f32 %v457
  %vm464 = vweird.f32 %v458
  %vm465 = vmor %vm463, %vm464
  %v466 = vsel %vm465, %v458, %v462
  %v467 = vand.u32 2147483647, %v457
  %vm468 = vcmp.eq.f32.partialorder %v467, 8.507059e+37
  %v469 = vand.u32 %v457, 2147483648
  %v470 = vor.u32 1.1754944e-38, %v469
  %v471 = vsel %vm468, %v470, %v466
  %v472 = vmul.f32 1.0, %v471
  %v473 = vadd.f32 %v451, %v321
  %475 = vrot.lane.b32.xlu0 %v473, 64
  %v476 = vpop.permute.xlu0 %475
  %v478 = vmul.f32 %v472, %v476
  %480 = vrot.lane.b32.xlu0 %v478, 64
  %v481 = vpop.permute.xlu0 %480
  %v483 = vadd.f32 %v426, %v481
  %v484 = vtanh.pop %v483
  %v485 = vsub.f32 1.0, %v472
  %487 = vrot.lane.b32.xlu0 %v484, 96
  %v488 = vpop.permute.xlu0 %487
  %v490 = vmul.f32 %v485, %v488
  %v491 = vmul.f32 %v472, %v342
  %v492 = vadd.f32 %v490, %v491
  %494 = vrot.lane.b32.xlu0 %v407, 96
  %v495 = vpop.permute.xlu0 %494
  %v496 = vsel %vm126, %v495, 0
  %498 = vmatpush.msra.mxu0 0.0
  %499 = vmatpush.msra.mxu0 0.0
  %500 = vmatpush.msra.mxu0 0.0
  %501 = vmatpush.msra.mxu0 0.0
  %502 = vmatpush.msra.mxu0 0.0
  %503 = vmatpush.msra.mxu0 0.0
  %504 = vmatpush.msra.mxu0 0.0
  %505 = vmatpush.msra.mxu0 0.0
  %506 = vmatpush.msra.mxu0 0.0
  %507 = vmatpush.msra.mxu0 0.0
  %508 = vmatpush.msra.mxu0 0.0
  %509 = vmatpush.msra.mxu0 0.0
  %510 = vmatpush.msra.mxu0 %v110
  %511 = vmatpush.msra.mxu0 %v109
  %512 = vmatpush.msra.mxu0 %v108
  %513 = vmatpush.msra.mxu0 %v107
  %514 = vmatmul.f32.gmra.mxu0 %v496
  %v515 = vpop.f32.mrf.mxu0
  %v516 = vadd.f32 0.0, %v515
  %517 = vdwg.mxu0
  %v518 = vadd.f32 %v93, %v516
  %v519 = vxor.u32 %v518, 2147483648
  %v520 = vmul.f32 %v519, 1.442695
  %v521 = vpow.pop %v520
  %v522 = vadd.f32 %v521, 1.0
  %v523 = vrcp.pop %v522
  %v524 = vmul.f32 %v522, %v523
  %v525 = vsub.f32 1.0, %v524
  %v526 = vmul.f32 %v523, %v525
  %v527 = vadd.f32 %v523, %v526
  %vm528 = vweird.f32 %v522
  %vm529 = vweird.f32 %v523
  %vm530 = vmor %vm528, %vm529
  %v531 = vsel %vm530, %v523, %v527
  %v532 = vand.u32 2147483647, %v522
  %vm533 = vcmp.eq.f32.partialorder %v532, 8.507059e+37
  %v534 = vand.u32 %v522, 2147483648
  %v535 = vor.u32 1.1754944e-38, %v534
  %v536 = vsel %vm533, %v535, %v531
  %v537 = vmul.f32 1.0, %v536
  %v538 = vadd.f32 %v516, %v172
  %540 = vrot.lane.b32.xlu0 %v538, 64
  %v541 = vpop.permute.xlu0 %540
  %v543 = vmul.f32 %v537, %v541
  %545 = vrot.lane.b32.xlu0 %v543, 64
  %v546 = vpop.permute.xlu0 %545
  %v548 = vadd.f32 %v93, %v546
  %v549 = vtanh.pop %v548
  %v550 = vsub.f32 1.0, %v537
  %552 = vrot.lane.b32.xlu0 %v549, 96
  %v553 = vpop.permute.xlu0 %552
  %v555 = vmul.f32 %v550, %v553
  %v556 = vmul.f32 %v537, %v407
  %v557 = vadd.f32 %v555, %v556
  %558 = vmatpush.msra.mxu0 0.0
  %559 = vmatpush.msra.mxu0 0.0
  %560 = vmatpush.msra.mxu0 0.0
  %561 = vmatpush.msra.mxu0 0.0
  %562 = vmatpush.msra.mxu0 0.0
  %563 = vmatpush.msra.mxu0 0.0
  %564 = vmatpush.msra.mxu0 0.0
  %565 = vmatpush.msra.mxu0 0.0
  %566 = vmatpush.msra.mxu0 0.0
  %567 = vmatpush.msra.mxu0 0.0
  %568 = vmatpush.msra.mxu0 0.0
  %569 = vmatpush.msra.mxu0 0.0
  %570 = vmatpush.msra.mxu0 %v119
  %571 = vmatpush.msra.mxu0 %v118
  %572 = vmatpush.msra.mxu0 %v117
  %573 = vmatpush.msra.mxu0 %v116
  %574 = vmatmul.f32.gmra.mxu0 %v496
  %v575 = vpop.f32.mrf.mxu0
  %v576 = vadd.f32 %v121, %v575
  %577 = vdwg.mxu0
  %579 = vrot.lane.b32.xlu0 %v492, 96
  %v580 = vpop.permute.xlu0 %579
  %v581 = vsel %vm126, %v580, 0
  %583 = vmatpush.msra.mxu0 0.0
  %584 = vmatpush.msra.mxu0 0.0
  %585 = vmatpush.msra.mxu0 0.0
  %586 = vmatpush.msra.mxu0 0.0
  %587 = vmatpush.msra.mxu0 0.0
  %588 = vmatpush.msra.mxu0 0.0
  %589 = vmatpush.msra.mxu0 0.0
  %590 = vmatpush.msra.mxu0 0.0
  %591 = vmatpush.msra.mxu0 0.0
  %592 = vmatpush.msra.mxu0 0.0
  %593 = vmatpush.msra.mxu0 0.0
  %594 = vmatpush.msra.mxu0 0.0
  %595 = vmatpush.msra.mxu0 %v115
  %596 = vmatpush.msra.mxu0 %v114
  %597 = vmatpush.msra.mxu0 %v113
  %598 = vmatpush.msra.mxu0 %v112
  %599 = vmatmul.f32.gmra.mxu0 %v581
  %v600 = vpop.f32.mrf.mxu0
  %v601 = vadd.f32 0.0, %v600
  %602 = vdwg.mxu0
  %v603 = vadd.f32 %v576, %v601
  %v604 = vxor.u32 %v603, 2147483648
  %v605 = vmul.f32 %v604, 1.442695
  %v606 = vpow.pop %v605
  %v607 = vadd.f32 %v606, 1.0
  %v608 = vrcp.pop %v607
  %v609 = vmul.f32 %v607, %v608
  %v610 = vsub.f32 1.0, %v609
  %v611 = vmul.f32 %v608, %v610
  %v612 = vadd.f32 %v608, %v611
  %vm613 = vweird.f32 %v607
  %vm614 = vweird.f32 %v608
  %vm615 = vmor %vm613, %vm614
  %v616 = vsel %vm615, %v608, %v612
  %v617 = vand.u32 2147483647, %v607
  %vm618 = vcmp.eq.f32.partialorder %v617, 8.507059e+37
  %v619 = vand.u32 %v607, 2147483648
  %v620 = vor.u32 1.1754944e-38, %v619
  %v621 = vsel %vm618, %v620, %v616
  %v622 = vmul.f32 1.0, %v621
  %v623 = vadd.f32 %v601, %v321
  %625 = vrot.lane.b32.xlu0 %v623, 64
  %v626 = vpop.permute.xlu0 %625
  %v628 = vmul.f32 %v622, %v626
  %630 = vrot.lane.b32.xlu0 %v628, 64
  %v631 = vpop.permute.xlu0 %630
  %v633 = vadd.f32 %v576, %v631
  %v634 = vtanh.pop %v633
  %v635 = vsub.f32 1.0, %v622
  %637 = vrot.lane.b32.xlu0 %v634, 96
  %v638 = vpop.permute.xlu0 %637
  %v640 = vmul.f32 %v635, %v638
  %v641 = vmul.f32 %v622, %v492
  %v642 = vadd.f32 %v640, %v641
  %644 = vrot.lane.b32.xlu0 %v557, 96
  %v645 = vpop.permute.xlu0 %644
  %v646 = vsel %vm126, %v645, 0
  %648 = vmatpush.msra.mxu0 0.0
  %649 = vmatpush.msra.mxu0 0.0
  %650 = vmatpush.msra.mxu0 0.0
  %651 = vmatpush.msra.mxu0 0.0
  %652 = vmatpush.msra.mxu0 0.0
  %653 = vmatpush.msra.mxu0 0.0
  %654 = vmatpush.msra.mxu0 0.0
  %655 = vmatpush.msra.mxu0 0.0
  %656 = vmatpush.msra.mxu0 0.0
  %657 = vmatpush.msra.mxu0 0.0
  %658 = vmatpush.msra.mxu0 0.0
  %659 = vmatpush.msra.mxu0 0.0
  %660 = vmatpush.msra.mxu0 %v110
  %661 = vmatpush.msra.mxu0 %v109
  %662 = vmatpush.msra.mxu0 %v108
  %663 = vmatpush.msra.mxu0 %v107
  %664 = vmatmul.f32.gmra.mxu0 %v646
  %v665 = vpop.f32.mrf.mxu0
  %v666 = vadd.f32 0.0, %v665
  %667 = vdwg.mxu0
  %v668 = vadd.f32 %v96, %v666
  %v669 = vxor.u32 %v668, 2147483648
  %v670 = vmul.f32 %v669, 1.442695
  %v671 = vpow.pop %v670
  %v672 = vadd.f32 %v671, 1.0
  %v673 = vrcp.pop %v672
  %v674 = vmul.f32 %v672, %v673
  %v675 = vsub.f32 1.0, %v674
  %v676 = vmul.f32 %v673, %v675
  %v677 = vadd.f32 %v673, %v676
  %vm678 = vweird.f32 %v672
  %vm679 = vweird.f32 %v673
  %vm680 = vmor %vm678, %vm679
  %v681 = vsel %vm680, %v673, %v677
  %v682 = vand.u32 2147483647, %v672
  %vm683 = vcmp.eq.f32.partialorder %v682, 8.507059e+37
  %v684 = vand.u32 %v672, 2147483648
  %v685 = vor.u32 1.1754944e-38, %v684
  %v686 = vsel %vm683, %v685, %v681
  %v687 = vmul.f32 1.0, %v686
  %v688 = vadd.f32 %v666, %v172
  %690 = vrot.lane.b32.xlu0 %v688, 64
  %v691 = vpop.permute.xlu0 %690
  %v693 = vmul.f32 %v687, %v691
  %695 = vrot.lane.b32.xlu0 %v693, 64
  %v696 = vpop.permute.xlu0 %695
  %v698 = vadd.f32 %v96, %v696
  %v699 = vtanh.pop %v698
  %v700 = vsub.f32 1.0, %v687
  %702 = vrot.lane.b32.xlu0 %v699, 96
  %v703 = vpop.permute.xlu0 %702
  %v705 = vmul.f32 %v700, %v703
  %v706 = vmul.f32 %v687, %v557
  %v707 = vadd.f32 %v705, %v706
  %708 = vmatpush.msra.mxu0 0.0
  %709 = vmatpush.msra.mxu0 0.0
  %710 = vmatpush.msra.mxu0 0.0
  %711 = vmatpush.msra.mxu0 0.0
  %712 = vmatpush.msra.mxu0 0.0
  %713 = vmatpush.msra.mxu0 0.0
  %714 = vmatpush.msra.mxu0 0.0
  %715 = vmatpush.msra.mxu0 0.0
  %716 = vmatpush.msra.mxu0 0.0
  %717 = vmatpush.msra.mxu0 0.0
  %718 = vmatpush.msra.mxu0 0.0
  %719 = vmatpush.msra.mxu0 0.0
  %720 = vmatpush.msra.mxu0 %v119
  %721 = vmatpush.msra.mxu0 %v118
  %722 = vmatpush.msra.mxu0 %v117
  %723 = vmatpush.msra.mxu0 %v116
  %724 = vmatmul.f32.gmra.mxu0 %v646
  %v725 = vpop.f32.mrf.mxu0
  %v726 = vadd.f32 %v121, %v725
  %727 = vdwg.mxu0
  %729 = vrot.lane.b32.xlu0 %v642, 96
  %v730 = vpop.permute.xlu0 %729
  %v731 = vsel %vm126, %v730, 0
  %733 = vmatpush.msra.mxu0 0.0
  %734 = vmatpush.msra.mxu0 0.0
  %735 = vmatpush.msra.mxu0 0.0
  %736 = vmatpush.msra.mxu0 0.0
  %737 = vmatpush.msra.mxu0 0.0
  %738 = vmatpush.msra.mxu0 0.0
  %739 = vmatpush.msra.mxu0 0.0
  %740 = vmatpush.msra.mxu0 0.0
  %741 = vmatpush.msra.mxu0 0.0
  %742 = vmatpush.msra.mxu0 0.0
  %743 = vmatpush.msra.mxu0 0.0
  %744 = vmatpush.msra.mxu0 0.0
  %745 = vmatpush.msra.mxu0 %v115
  %746 = vmatpush.msra.mxu0 %v114
  %747 = vmatpush.msra.mxu0 %v113
  %748 = vmatpush.msra.mxu0 %v112
  %749 = vmatmul.f32.gmra.mxu0 %v731
  %v750 = vpop.f32.mrf.mxu0
  %v751 = vadd.f32 0.0, %v750
  %752 = vdwg.mxu0
  %v753 = vadd.f32 %v726, %v751
  %v754 = vxor.u32 %v753, 2147483648
  %v755 = vmul.f32 %v754, 1.442695
  %v756 = vpow.pop %v755
  %v757 = vadd.f32 %v756, 1.0
  %v758 = vrcp.pop %v757
  %v759 = vmul.f32 %v757, %v758
  %v760 = vsub.f32 1.0, %v759
  %v761 = vmul.f32 %v758, %v760
  %v762 = vadd.f32 %v758, %v761
  %vm763 = vweird.f32 %v757
  %vm764 = vweird.f32 %v758
  %vm765 = vmor %vm763, %vm764
  %v766 = vsel %vm765, %v758, %v762
  %v767 = vand.u32 2147483647, %v757
  %vm768 = vcmp.eq.f32.partialorder %v767, 8.507059e+37
  %v769 = vand.u32 %v757, 2147483648
  %v770 = vor.u32 1.1754944e-38, %v769
  %v771 = vsel %vm768, %v770, %v766
  %v772 = vmul.f32 1.0, %v771
  %v773 = vadd.f32 %v751, %v321
  %775 = vrot.lane.b32.xlu0 %v773, 64
  %v776 = vpop.permute.xlu0 %775
  %v778 = vmul.f32 %v772, %v776
  %780 = vrot.lane.b32.xlu0 %v778, 64
  %v781 = vpop.permute.xlu0 %780
  %v783 = vadd.f32 %v726, %v781
  %v784 = vtanh.pop %v783
  %v785 = vsub.f32 1.0, %v772
  %787 = vrot.lane.b32.xlu0 %v784, 96
  %v788 = vpop.permute.xlu0 %787
  %v790 = vmul.f32 %v785, %v788
  %v791 = vmul.f32 %v772, %v642
  %v792 = vadd.f32 %v790, %v791
  %794 = vrot.lane.b32.xlu0 %v707, 96
  %v795 = vpop.permute.xlu0 %794
  %v796 = vsel %vm126, %v795, 0
  %798 = vmatpush.msra.mxu0 0.0
  %799 = vmatpush.msra.mxu0 0.0
  %800 = vmatpush.msra.mxu0 0.0
  %801 = vmatpush.msra.mxu0 0.0
  %802 = vmatpush.msra.mxu0 0.0
  %803 = vmatpush.msra.mxu0 0.0
  %804 = vmatpush.msra.mxu0 0.0
  %805 = vmatpush.msra.mxu0 0.0
  %806 = vmatpush.msra.mxu0 0.0
  %807 = vmatpush.msra.mxu0 0.0
  %808 = vmatpush.msra.mxu0 0.0
  %809 = vmatpush.msra.mxu0 0.0
  %810 = vmatpush.msra.mxu0 %v110
  %811 = vmatpush.msra.mxu0 %v109
  %812 = vmatpush.msra.mxu0 %v108
  %813 = vmatpush.msra.mxu0 %v107
  %814 = vmatmul.f32.gmra.mxu0 %v796
  %v815 = vpop.f32.mrf.mxu0
  %v816 = vadd.f32 0.0, %v815
  %817 = vdwg.mxu0
  %v818 = vadd.f32 %v99, %v816
  %v819 = vxor.u32 %v818, 2147483648
  %v820 = vmul.f32 %v819, 1.442695
  %v821 = vpow.pop %v820
  %v822 = vadd.f32 %v821, 1.0
  %v823 = vrcp.pop %v822
  %v824 = vmul.f32 %v822, %v823
  %v825 = vsub.f32 1.0, %v824
  %v826 = vmul.f32 %v823, %v825
  %v827 = vadd.f32 %v823, %v826
  %vm828 = vweird.f32 %v822
  %vm829 = vweird.f32 %v823
  %vm830 = vmor %vm828, %vm829
  %v831 = vsel %vm830, %v823, %v827
  %v832 = vand.u32 2147483647, %v822
  %vm833 = vcmp.eq.f32.partialorder %v832, 8.507059e+37
  %v834 = vand.u32 %v822, 2147483648
  %v835 = vor.u32 1.1754944e-38, %v834
  %v836 = vsel %vm833, %v835, %v831
  %v837 = vmul.f32 1.0, %v836
  %v838 = vadd.f32 %v816, %v172
  %840 = vrot.lane.b32.xlu0 %v838, 64
  %v841 = vpop.permute.xlu0 %840
  %v843 = vmul.f32 %v837, %v841
  %845 = vrot.lane.b32.xlu0 %v843, 64
  %v846 = vpop.permute.xlu0 %845
  %v848 = vadd.f32 %v99, %v846
  %v849 = vtanh.pop %v848
  %v850 = vsub.f32 1.0, %v837
  %852 = vrot.lane.b32.xlu0 %v849, 96
  %v853 = vpop.permute.xlu0 %852
  %v855 = vmul.f32 %v850, %v853
  %v856 = vmul.f32 %v837, %v707
  %v857 = vadd.f32 %v855, %v856
  %858 = vmatpush.msra.mxu0 0.0
  %859 = vmatpush.msra.mxu0 0.0
  %860 = vmatpush.msra.mxu0 0.0
  %861 = vmatpush.msra.mxu0 0.0
  %862 = vmatpush.msra.mxu0 0.0
  %863 = vmatpush.msra.mxu0 0.0
  %864 = vmatpush.msra.mxu0 0.0
  %865 = vmatpush.msra.mxu0 0.0
  %866 = vmatpush.msra.mxu0 0.0
  %867 = vmatpush.msra.mxu0 0.0
  %868 = vmatpush.msra.mxu0 0.0
  %869 = vmatpush.msra.mxu0 0.0
  %870 = vmatpush.msra.mxu0 %v119
  %871 = vmatpush.msra.mxu0 %v118
  %872 = vmatpush.msra.mxu0 %v117
  %873 = vmatpush.msra.mxu0 %v116
  %874 = vmatmul.f32.gmra.mxu0 %v796
  %v875 = vpop.f32.mrf.mxu0
  %v876 = vadd.f32 %v121, %v875
  %877 = vdwg.mxu0
  %879 = vrot.lane.b32.xlu0 %v792, 96
  %v880 = vpop.permute.xlu0 %879
  %v881 = vsel %vm126, %v880, 0
  %883 = vmatpush.msra.mxu0 0.0
  %884 = vmatpush.msra.mxu0 0.0
  %885 = vmatpush.msra.mxu0 0.0
  %886 = vmatpush.msra.mxu0 0.0
  %887 = vmatpush.msra.mxu0 0.0
  %888 = vmatpush.msra.mxu0 0.0
  %889 = vmatpush.msra.mxu0 0.0
  %890 = vmatpush.msra.mxu0 0.0
  %891 = vmatpush.msra.mxu0 0.0
  %892 = vmatpush.msra.mxu0 0.0
  %893 = vmatpush.msra.mxu0 0.0
  %894 = vmatpush.msra.mxu0 0.0
  %895 = vmatpush.msra.mxu0 %v115
  %896 = vmatpush.msra.mxu0 %v114
  %897 = vmatpush.msra.mxu0 %v113
  %898 = vmatpush.msra.mxu0 %v112
  %899 = vmatmul.f32.gmra.mxu0 %v881
  %v900 = vpop.f32.mrf.mxu0
  %v901 = vadd.f32 0.0, %v900
  %902 = vdwg.mxu0
  %v903 = vadd.f32 %v876, %v901
  %v904 = vxor.u32 %v903, 2147483648
  %v905 = vmul.f32 %v904, 1.442695
  %v906 = vpow.pop %v905
  %v907 = vadd.f32 %v906, 1.0
  %v908 = vrcp.pop %v907
  %v909 = vmul.f32 %v907, %v908
  %v910 = vsub.f32 1.0, %v909
  %v911 = vmul.f32 %v908, %v910
  %v912 = vadd.f32 %v908, %v911
  %vm913 = vweird.f32 %v907
  %vm914 = vweird.f32 %v908
  %vm915 = vmor %vm913, %vm914
  %v916 = vsel %vm915, %v908, %v912
  %v917 = vand.u32 2147483647, %v907
  %vm918 = vcmp.eq.f32.partialorder %v917, 8.507059e+37
  %v919 = vand.u32 %v907, 2147483648
  %v920 = vor.u32 1.1754944e-38, %v919
  %v921 = vsel %vm918, %v920, %v916
  %v922 = vmul.f32 1.0, %v921
  %v923 = vadd.f32 %v901, %v321
  %925 = vrot.lane.b32.xlu0 %v923, 64
  %v926 = vpop.permute.xlu0 %925
  %v928 = vmul.f32 %v922, %v926
  %930 = vrot.lane.b32.xlu0 %v928, 64
  %v931 = vpop.permute.xlu0 %930
  %v933 = vadd.f32 %v876, %v931
  %v934 = vtanh.pop %v933
  %v935 = vsub.f32 1.0, %v922
  %937 = vrot.lane.b32.xlu0 %v934, 96
  %v938 = vpop.permute.xlu0 %937
  %v940 = vmul.f32 %v935, %v938
  %v941 = vmul.f32 %v922, %v792
  %v942 = vadd.f32 %v940, %v941
  %944 = vrot.lane.b32.xlu0 %v857, 96
  %v945 = vpop.permute.xlu0 %944
  %v946 = vsel %vm126, %v945, 0
  %948 = vmatpush.msra.mxu0 0.0
  %949 = vmatpush.msra.mxu0 0.0
  %950 = vmatpush.msra.mxu0 0.0
  %951 = vmatpush.msra.mxu0 0.0
  %952 = vmatpush.msra.mxu0 0.0
  %953 = vmatpush.msra.mxu0 0.0
  %954 = vmatpush.msra.mxu0 0.0
  %955 = vmatpush.msra.mxu0 0.0
  %956 = vmatpush.msra.mxu0 0.0
  %957 = vmatpush.msra.mxu0 0.0
  %958 = vmatpush.msra.mxu0 0.0
  %959 = vmatpush.msra.mxu0 0.0
  %960 = vmatpush.msra.mxu0 %v110
  %961 = vmatpush.msra.mxu0 %v109
  %962 = vmatpush.msra.mxu0 %v108
  %963 = vmatpush.msra.mxu0 %v107
  %964 = vmatmul.f32.gmra.mxu0 %v946
  %v965 = vpop.f32.mrf.mxu0
  %v966 = vadd.f32 0.0, %v965
  %967 = vdwg.mxu0
  %v968 = vadd.f32 %v102, %v966
  %v969 = vxor.u32 %v968, 2147483648
  %v970 = vmul.f32 %v969, 1.442695
  %v971 = vpow.pop %v970
  %v972 = vadd.f32 %v971, 1.0
  %v973 = vrcp.pop %v972
  %v974 = vmul.f32 %v972, %v973
  %v975 = vsub.f32 1.0, %v974
  %v976 = vmul.f32 %v973, %v975
  %v977 = vadd.f32 %v973, %v976
  %vm978 = vweird.f32 %v972
  %vm979 = vweird.f32 %v973
  %vm980 = vmor %vm978, %vm979
  %v981 = vsel %vm980, %v973, %v977
  %v982 = vand.u32 2147483647, %v972
  %vm983 = vcmp.eq.f32.partialorder %v982, 8.507059e+37
  %v984 = vand.u32 %v972, 2147483648
  %v985 = vor.u32 1.1754944e-38, %v984
  %v986 = vsel %vm983, %v985, %v981
  %v987 = vmul.f32 1.0, %v986
  %v988 = vadd.f32 %v966, %v172
  %990 = vrot.lane.b32.xlu0 %v988, 64
  %v991 = vpop.permute.xlu0 %990
  %v993 = vmul.f32 %v987, %v991
  %995 = vrot.lane.b32.xlu0 %v993, 64
  %v996 = vpop.permute.xlu0 %995
  %v998 = vadd.f32 %v102, %v996
  %v999 = vtanh.pop %v998
  %v1000 = vsub.f32 1.0, %v987
  %1002 = vrot.lane.b32.xlu0 %v999, 96
  %v1003 = vpop.permute.xlu0 %1002
  %v1005 = vmul.f32 %v1000, %v1003
  %v1006 = vmul.f32 %v987, %v857
  %v1007 = vadd.f32 %v1005, %v1006
  %1008 = vmatpush.msra.mxu0 0.0
  %1009 = vmatpush.msra.mxu0 0.0
  %1010 = vmatpush.msra.mxu0 0.0
  %1011 = vmatpush.msra.mxu0 0.0
  %1012 = vmatpush.msra.mxu0 0.0
  %1013 = vmatpush.msra.mxu0 0.0
  %1014 = vmatpush.msra.mxu0 0.0
  %1015 = vmatpush.msra.mxu0 0.0
  %1016 = vmatpush.msra.mxu0 0.0
  %1017 = vmatpush.msra.mxu0 0.0
  %1018 = vmatpush.msra.mxu0 0.0
  %1019 = vmatpush.msra.mxu0 0.0
  %1020 = vmatpush.msra.mxu0 %v119
  %1021 = vmatpush.msra.mxu0 %v118
  %1022 = vmatpush.msra.mxu0 %v117
  %1023 = vmatpush.msra.mxu0 %v116
  %1024 = vmatmul.f32.gmra.mxu0 %v946
  %v1025 = vpop.f32.mrf.mxu0
  %v1026 = vadd.f32 %v121, %v1025
  %1027 = vdwg.mxu0
  %1029 = vrot.lane.b32.xlu0 %v942, 96
  %v1030 = vpop.permute.xlu0 %1029
  %v1031 = vsel %vm126, %v1030, 0
  %1033 = vmatpush.msra.mxu0 0.0
  %1034 = vmatpush.msra.mxu0 0.0
  %1035 = vmatpush.msra.mxu0 0.0
  %1036 = vmatpush.msra.mxu0 0.0
  %1037 = vmatpush.msra.mxu0 0.0
  %1038 = vmatpush.msra.mxu0 0.0
  %1039 = vmatpush.msra.mxu0 0.0
  %1040 = vmatpush.msra.mxu0 0.0
  %1041 = vmatpush.msra.mxu0 0.0
  %1042 = vmatpush.msra.mxu0 0.0
  %1043 = vmatpush.msra.mxu0 0.0
  %1044 = vmatpush.msra.mxu0 0.0
  %1045 = vmatpush.msra.mxu0 %v115
  %1046 = vmatpush.msra.mxu0 %v114
  %1047 = vmatpush.msra.mxu0 %v113
  %1048 = vmatpush.msra.mxu0 %v112
  %1049 = vmatmul.f32.gmra.mxu0 %v1031
  %v1050 = vpop.f32.mrf.mxu0
  %v1051 = vadd.f32 0.0, %v1050
  %1052 = vdwg.mxu0
  %v1053 = vadd.f32 %v1026, %v1051
  %v1054 = vxor.u32 %v1053, 2147483648
  %v1055 = vmul.f32 %v1054, 1.442695
  %v1056 = vpow.pop %v1055
  %v1057 = vadd.f32 %v1056, 1.0
  %v1058 = vrcp.pop %v1057
  %v1059 = vmul.f32 %v1057, %v1058
  %v1060 = vsub.f32 1.0, %v1059
  %v1061 = vmul.f32 %v1058, %v1060
  %v1062 = vadd.f32 %v1058, %v1061
  %vm1063 = vweird.f32 %v1057
  %vm1064 = vweird.f32 %v1058
  %vm1065 = vmor %vm1063, %vm1064
  %v1066 = vsel %vm1065, %v1058, %v1062
  %v1067 = vand.u32 2147483647, %v1057
  %vm1068 = vcmp.eq.f32.partialorder %v1067, 8.507059e+37
  %v1069 = vand.u32 %v1057, 2147483648
  %v1070 = vor.u32 1.1754944e-38, %v1069
  %v1071 = vsel %vm1068, %v1070, %v1066
  %v1072 = vmul.f32 1.0, %v1071
  %v1073 = vadd.f32 %v1051, %v321
  %1075 = vrot.lane.b32.xlu0 %v1073, 64
  %v1076 = vpop.permute.xlu0 %1075
  %v1078 = vmul.f32 %v1072, %v1076
  %1080 = vrot.lane.b32.xlu0 %v1078, 64
  %v1081 = vpop.permute.xlu0 %1080
  %v1083 = vadd.f32 %v1026, %v1081
  %v1084 = vtanh.pop %v1083
  %v1085 = vsub.f32 1.0, %v1072
  %1087 = vrot.lane.b32.xlu0 %v1084, 96
  %v1088 = vpop.permute.xlu0 %1087
  %v1090 = vmul.f32 %v1085, %v1088
  %v1091 = vmul.f32 %v1072, %v942
  %v1092 = vadd.f32 %v1090, %v1091
  %1094 = vrot.lane.b32.xlu0 %v1007, 96
  %v1095 = vpop.permute.xlu0 %1094
  %v1096 = vsel %vm126, %v1095, 0
  %1098 = vmatpush.msra.mxu0 0.0
  %1099 = vmatpush.msra.mxu0 0.0
  %1100 = vmatpush.msra.mxu0 0.0
  %1101 = vmatpush.msra.mxu0 0.0
  %1102 = vmatpush.msra.mxu0 0.0
  %1103 = vmatpush.msra.mxu0 0.0
  %1104 = vmatpush.msra.mxu0 0.0
  %1105 = vmatpush.msra.mxu0 0.0
  %1106 = vmatpush.msra.mxu0 0.0
  %1107 = vmatpush.msra.mxu0 0.0
  %1108 = vmatpush.msra.mxu0 0.0
  %1109 = vmatpush.msra.mxu0 0.0
  %1110 = vmatpush.msra.mxu0 %v110
  %1111 = vmatpush.msra.mxu0 %v109
  %1112 = vmatpush.msra.mxu0 %v108
  %1113 = vmatpush.msra.mxu0 %v107
  %1114 = vmatmul.f32.gmra.mxu0 %v1096
  %v1115 = vpop.f32.mrf.mxu0
  %v1116 = vadd.f32 0.0, %v1115
  %1117 = vdwg.mxu0
  %v1118 = vadd.f32 %v105, %v1116
  %v1119 = vxor.u32 %v1118, 2147483648
  %v1120 = vmul.f32 %v1119, 1.442695
  %v1121 = vpow.pop %v1120
  %v1122 = vadd.f32 %v1121, 1.0
  %v1123 = vrcp.pop %v1122
  %v1124 = vmul.f32 %v1122, %v1123
  %v1125 = vsub.f32 1.0, %v1124
  %v1126 = vmul.f32 %v1123, %v1125
  %v1127 = vadd.f32 %v1123, %v1126
  %vm1128 = vweird.f32 %v1122
  %vm1129 = vweird.f32 %v1123
  %vm1130 = vmor %vm1128, %vm1129
  %v1131 = vsel %vm1130, %v1123, %v1127
  %v1132 = vand.u32 2147483647, %v1122
  %vm1133 = vcmp.eq.f32.partialorder %v1132, 8.507059e+37
  %v1134 = vand.u32 %v1122, 2147483648
  %v1135 = vor.u32 1.1754944e-38, %v1134
  %v1136 = vsel %vm1133, %v1135, %v1131
  %v1137 = vmul.f32 1.0, %v1136
  %v1138 = vadd.f32 %v1116, %v172
  %1140 = vrot.lane.b32.xlu0 %v1138, 64
  %v1141 = vpop.permute.xlu0 %1140
  %v1143 = vmul.f32 %v1137, %v1141
  %1145 = vrot.lane.b32.xlu0 %v1143, 64
  %v1146 = vpop.permute.xlu0 %1145
  %v1148 = vadd.f32 %v105, %v1146
  %v1149 = vtanh.pop %v1148
  %v1150 = vsub.f32 1.0, %v1137
  %1152 = vrot.lane.b32.xlu0 %v1149, 96
  %v1153 = vpop.permute.xlu0 %1152
  %v1155 = vmul.f32 %v1150, %v1153
  %v1156 = vmul.f32 %v1137, %v1007
  %v1157 = vadd.f32 %v1155, %v1156
  %1158 = vmatpush.msra.mxu0 0.0
  %1159 = vmatpush.msra.mxu0 0.0
  %1160 = vmatpush.msra.mxu0 0.0
  %1161 = vmatpush.msra.mxu0 0.0
  %1162 = vmatpush.msra.mxu0 0.0
  %1163 = vmatpush.msra.mxu0 0.0
  %1164 = vmatpush.msra.mxu0 0.0
  %1165 = vmatpush.msra.mxu0 0.0
  %1166 = vmatpush.msra.mxu0 0.0
  %1167 = vmatpush.msra.mxu0 0.0
  %1168 = vmatpush.msra.mxu0 0.0
  %1169 = vmatpush.msra.mxu0 0.0
  %1170 = vmatpush.msra.mxu0 %v119
  %1171 = vmatpush.msra.mxu0 %v118
  %1172 = vmatpush.msra.mxu0 %v117
  %1173 = vmatpush.msra.mxu0 %v116
  %1174 = vmatmul.f32.gmra.mxu0 %v1096
  %v1175 = vpop.f32.mrf.mxu0
  %v1176 = vadd.f32 %v121, %v1175
  %1177 = vdwg.mxu0
  %1179 = vrot.lane.b32.xlu0 %v1092, 96
  %v1180 = vpop.permute.xlu0 %1179
  %v1181 = vsel %vm126, %v1180, 0
  %1183 = vmatpush.msra.mxu0 0.0
  %1184 = vmatpush.msra.mxu0 0.0
  %1185 = vmatpush.msra.mxu0 0.0
  %1186 = vmatpush.msra.mxu0 0.0
  %1187 = vmatpush.msra.mxu0 0.0
  %1188 = vmatpush.msra.mxu0 0.0
  %1189 = vmatpush.msra.mxu0 0.0
  %1190 = vmatpush.msra.mxu0 0.0
  %1191 = vmatpush.msra.mxu0 0.0
  %1192 = vmatpush.msra.mxu0 0.0
  %1193 = vmatpush.msra.mxu0 0.0
  %1194 = vmatpush.msra.mxu0 0.0
  %1195 = vmatpush.msra.mxu0 %v115
  %1196 = vmatpush.msra.mxu0 %v114
  %1197 = vmatpush.msra.mxu0 %v113
  %1198 = vmatpush.msra.mxu0 %v112
  %1199 = vmatmul.f32.gmra.mxu0 %v1181
  %v1200 = vpop.f32.mrf.mxu0
  %v1201 = vadd.f32 0.0, %v1200
  %1202 = vdwg.mxu0
  %v1203 = vadd.f32 %v1176, %v1201
  %v1204 = vxor.u32 %v1203, 2147483648
  %v1205 = vmul.f32 %v1204, 1.442695
  %v1206 = vpow.pop %v1205
  %v1207 = vadd.f32 %v1206, 1.0
  %v1208 = vrcp.pop %v1207
  %v1209 = vmul.f32 %v1207, %v1208
  %v1210 = vsub.f32 1.0, %v1209
  %v1211 = vmul.f32 %v1208, %v1210
  %v1212 = vadd.f32 %v1208, %v1211
  %vm1213 = vweird.f32 %v1207
  %vm1214 = vweird.f32 %v1208
  %vm1215 = vmor %vm1213, %vm1214
  %v1216 = vsel %vm1215, %v1208, %v1212
  %v1217 = vand.u32 2147483647, %v1207
  %vm1218 = vcmp.eq.f32.partialorder %v1217, 8.507059e+37
  %v1219 = vand.u32 %v1207, 2147483648
  %v1220 = vor.u32 1.1754944e-38, %v1219
  %v1221 = vsel %vm1218, %v1220, %v1216
  %v1222 = vmul.f32 1.0, %v1221
  %v1223 = vadd.f32 %v1201, %v321
  %1225 = vrot.lane.b32.xlu0 %v1223, 64
  %v1226 = vpop.permute.xlu0 %1225
  %v1228 = vmul.f32 %v1222, %v1226
  %1230 = vrot.lane.b32.xlu0 %v1228, 64
  %v1231 = vpop.permute.xlu0 %1230
  %v1233 = vadd.f32 %v1176, %v1231
  %v1234 = vtanh.pop %v1233
  %v1235 = vsub.f32 1.0, %v1222
  %1237 = vrot.lane.b32.xlu0 %v1234, 96
  %v1238 = vpop.permute.xlu0 %1237
  %v1240 = vmul.f32 %v1235, %v1238
  %v1241 = vmul.f32 %v1222, %v1092
  %v1242 = vadd.f32 %v1240, %v1241
  %1244 = vrot.lane.b32.xlu0 %v1157, 96
  %v1245 = vpop.permute.xlu0 %1244
  %v1246 = vsel %vm126, %v1245, 0
  %1248 = vmatpush.msra.mxu0 0.0
  %1249 = vmatpush.msra.mxu0 0.0
  %1250 = vmatpush.msra.mxu0 0.0
  %1251 = vmatpush.msra.mxu0 0.0
  %1252 = vmatpush.msra.mxu0 0.0
  %1253 = vmatpush.msra.mxu0 0.0
  %1254 = vmatpush.msra.mxu0 0.0
  %1255 = vmatpush.msra.mxu0 0.0
  %1256 = vmatpush.msra.mxu0 0.0
  %1257 = vmatpush.msra.mxu0 0.0
  %1258 = vmatpush.msra.mxu0 0.0
  %1259 = vmatpush.msra.mxu0 0.0
  %1260 = vmatpush.msra.mxu0 %v119
  %1261 = vmatpush.msra.mxu0 %v118
  %1262 = vmatpush.msra.mxu0 %v117
  %1263 = vmatpush.msra.mxu0 %v116
  %1264 = vmatmul.f32.gmra.mxu0 %v1246
  %v1265 = vpop.f32.mrf.mxu0
  %v1266 = vadd.f32 %v121, %v1265
  %1267 = vdwg.mxu0
  %1269 = vrot.lane.b32.xlu0 %v1242, 96
  %v1270 = vpop.permute.xlu0 %1269
  %v1271 = vsel %vm126, %v1270, 0
  %1273 = vmatpush.msra.mxu0 0.0
  %1274 = vmatpush.msra.mxu0 0.0
  %1275 = vmatpush.msra.mxu0 0.0
  %1276 = vmatpush.msra.mxu0 0.0
  %1277 = vmatpush.msra.mxu0 0.0
  %1278 = vmatpush.msra.mxu0 0.0
  %1279 = vmatpush.msra.mxu0 0.0
  %1280 = vmatpush.msra.mxu0 0.0
  %1281 = vmatpush.msra.mxu0 0.0
  %1282 = vmatpush.msra.mxu0 0.0
  %1283 = vmatpush.msra.mxu0 0.0
  %1284 = vmatpush.msra.mxu0 0.0
  %1285 = vmatpush.msra.mxu0 %v115
  %1286 = vmatpush.msra.mxu0 %v114
  %1287 = vmatpush.msra.mxu0 %v113
  %1288 = vmatpush.msra.mxu0 %v112
  %1289 = vmatmul.f32.gmra.mxu0 %v1271
  %v1290 = vpop.f32.mrf.mxu0
  %v1291 = vadd.f32 0.0, %v1290
  %1292 = vdwg.mxu0
  %v1293 = vadd.f32 %v1266, %v1291
  %v1294 = vxor.u32 %v1293, 2147483648
  %v1295 = vmul.f32 %v1294, 1.442695
  %v1296 = vpow.pop %v1295
  %v1297 = vadd.f32 %v1296, 1.0
  %v1298 = vrcp.pop %v1297
  %v1299 = vmul.f32 %v1297, %v1298
  %v1300 = vsub.f32 1.0, %v1299
  %v1301 = vmul.f32 %v1298, %v1300
  %v1302 = vadd.f32 %v1298, %v1301
  %vm1303 = vweird.f32 %v1297
  %vm1304 = vweird.f32 %v1298
  %vm1305 = vmor %vm1303, %vm1304
  %v1306 = vsel %vm1305, %v1298, %v1302
  %v1307 = vand.u32 2147483647, %v1297
  %vm1308 = vcmp.eq.f32.partialorder %v1307, 8.507059e+37
  %v1309 = vand.u32 %v1297, 2147483648
  %v1310 = vor.u32 1.1754944e-38, %v1309
  %v1311 = vsel %vm1308, %v1310, %v1306
  %v1312 = vmul.f32 1.0, %v1311
  %v1313 = vadd.f32 %v1291, %v321
  %1315 = vrot.lane.b32.xlu0 %v1313, 64
  %v1316 = vpop.permute.xlu0 %1315
  %v1318 = vmul.f32 %v1312, %v1316
  %1320 = vrot.lane.b32.xlu0 %v1318, 64
  %v1321 = vpop.permute.xlu0 %1320
  %v1323 = vadd.f32 %v1266, %v1321
  %v1324 = vtanh.pop %v1323
  %v1325 = vsub.f32 1.0, %v1312
  %1327 = vrot.lane.b32.xlu0 %v1324, 96
  %v1328 = vpop.permute.xlu0 %1327
  %v1330 = vmul.f32 %v1325, %v1328
  %v1331 = vmul.f32 %v1312, %v1242
  %v1332 = vadd.f32 %v1330, %v1331
  %v1333 = vld [vmem:[%s6] sm:$0xff]
  %v1334 = vld [vmem:[%s6 + $0x8] sm:$0xff]
  %v1335 = vld [vmem:[%s6 + $0x10] sm:$0xff]
  %v1336 = vld [vmem:[%s6 + $0x18] sm:$0xff]
  %v1337 = vld [vmem:[%s6 + $0x20] sm:$0x1]
  %v1338 = vperm.slane %v1337, 0
  %1340 = vrot.lane.b32.xlu0 %v1332, 96
  %v1341 = vpop.permute.xlu0 %1340
  %v1342 = vsel %vm126, %v1341, 0
  %1344 = vmatpush.msra.mxu0 0.0
  %1345 = vmatpush.msra.mxu0 0.0
  %1346 = vmatpush.msra.mxu0 0.0
  %1347 = vmatpush.msra.mxu0 0.0
  %1348 = vmatpush.msra.mxu0 0.0
  %1349 = vmatpush.msra.mxu0 0.0
  %1350 = vmatpush.msra.mxu0 0.0
  %1351 = vmatpush.msra.mxu0 0.0
  %1352 = vmatpush.msra.mxu0 0.0
  %1353 = vmatpush.msra.mxu0 0.0
  %1354 = vmatpush.msra.mxu0 0.0
  %1355 = vmatpush.msra.mxu0 0.0
  %1356 = vmatpush.msra.mxu0 %v1336
  %1357 = vmatpush.msra.mxu0 %v1335
  %1358 = vmatpush.msra.mxu0 %v1334
  %1359 = vmatpush.msra.mxu0 %v1333
  %1360 = vmatmul.f32.gmra.mxu0 %v1342
  %v1361 = vpop.f32.mrf.mxu0
  %v1362 = vadd.f32 %v1338, %v1361
  %1363 = vdwg.mxu0
  %vm1364 = vcmask 1024
  %1365 = vst.msk [vmem:[%s7] sm:$0x3] %vm1364, %v1362
  // Predicated region
  $region30: #{stock_gru_forward.1} parent=0 // pred_check
    _
  $region31: #{stock_gru_forward.1} parent=0 // pred_check_branch
    %1367 = sbr.rel (0) target = $region33
  $region32: #{stock_gru_forward.1} parent=0 // pred_region
    _
  $region33: #{stock_gru_forward.1} parent=0 // pred_fallthru
    _
  // Predicated region
  $region34: #{stock_gru_forward.1} parent=0 // pred_check
    _
  $region35: #{stock_gru_forward.1} parent=0 // pred_check_branch
    %1369 = sbr.rel (0) target = $region37
  $region36: #{stock_gru_forward.1} parent=0 // pred_region
    _
  $region37: #{stock_gru_forward.1} parent=0 // pred_fallthru
    _

</llo_original>
